<compile_context>
chip_gen: v6e
topology: v6e:2x2x1
jax: 0.10.0
libtpu: 0.0.40
codegen_flags: <defaults>
</compile_context>

<pallas_src>
import jax
import jax.numpy as jnp
import numpy as np
from jax.experimental import pallas as pl
from jax.experimental.pallas import tpu as pltpu


def lstm_head_kernel(x_ref, wih_ref, whh_ref, b_ref,
                     w1_ref, b1_ref, w2_ref, b2_ref,
                     out_ref, h_sc, c_sc, xg_sc):
    """One grid step == one slab of Tb timesteps for one batch chunk.

    x_ref:   (Tb, Bp2, D)   bf16 timestep slab (time-major, batch chunk)
    wih_ref: (D, 4Hp)  bf16  input->gates weights (gate order i,f,o,g; padded)
    whh_ref: (Hp, 4Hp) bf16  hidden->gates weights
    b_ref:   (1, 4Hp)  f32   b_ih + b_hh (reordered/padded)
    w1_ref:  (Hp, Hp) bf16, b1_ref: (1, Hp) f32    fc1
    w2_ref:  (Hp, Op) bf16, b2_ref: (1, Op) f32    fc2 (output padded to Op)
    out_ref: (Bp2, Op) f32   logits, written only at the last time step
    h_sc, c_sc: (Bp2, Hp) f32  VMEM-resident recurrent state
    xg_sc:   (Tb, Bp2, 4Hp) f32 precomputed input-gate projections
    """
    tb = pl.program_id(1)
    Tb, Bp2, D = x_ref.shape
    Hp = h_sc.shape[-1]

    @pl.when(tb == 0)
    def _init():
        h_sc[...] = jnp.zeros_like(h_sc)
        c_sc[...] = jnp.zeros_like(c_sc)

    # --- Hoisted off the serial chain: bf16 input projection for all Tb
    # timesteps in one batched MXU call (f32 accumulate), bias added once.
    x_blk = x_ref[...].reshape(Tb * Bp2, D)
    xg = jnp.dot(x_blk, wih_ref[...], preferred_element_type=jnp.float32) + b_ref[...]
    xg_sc[...] = xg.reshape(Tb, Bp2, 4 * Hp)

    whh = whh_ref[...]          # hoisted grid-invariant load (bf16)
    h0 = h_sc[...]
    c0 = c_sc[...]

    def step(t, carry):
        h, c = carry
        gates = xg_sc[t] + jnp.dot(h.astype(jnp.bfloat16), whh,
                                   preferred_element_type=jnp.float32)  # (Bp2, 4Hp) f32
        # Gate order is (i, f, o, g): one sigmoid pass over 3Hp lanes, one tanh
        # over Hp lanes.  All slices are whole-128-lane windows (Hp % 128 == 0).
        sig = jax.nn.sigmoid(gates[:, :3 * Hp])
        g_g = jnp.tanh(gates[:, 3 * Hp:])
        i_g = sig[:, 0 * Hp:1 * Hp]
        f_g = sig[:, 1 * Hp:2 * Hp]
        o_g = sig[:, 2 * Hp:3 * Hp]
        c = f_g * c + i_g * g_g
        h = o_g * jnp.tanh(c)
        return (h, c)

    unroll = Tb if Tb <= 8 else 8   # bounded unroll: LLO visibility w/o spills
    h_f, c_f = jax.lax.fori_loop(0, Tb, step, (h0, c0), unroll=unroll)
    h_sc[...] = h_f
    c_sc[...] = c_f

    @pl.when(tb == pl.num_programs(1) - 1)
    def _head():
        # fc1 -> ReLU -> (dropout == identity in eval) -> fc2 on the final h.
        hid = jnp.dot(h_f.astype(jnp.bfloat16), w1_ref[...],
                      preferred_element_type=jnp.float32) + b1_ref[...]
        hid = jnp.maximum(hid, 0.0)
        y = jnp.dot(hid.astype(jnp.bfloat16), w2_ref[...],
                    preferred_element_type=jnp.float32) + b2_ref[...]
        out_ref[...] = y.astype(out_ref.dtype)


# ------------------------------- wrapper ------------------------------------

def _round_up(n, m):
    return ((n + m - 1) // m) * m


def _largest_divisor_leq(n, cap):
    for d in range(min(n, cap), 0, -1):
        if n % d == 0:
            return d
    return 1


def _physical_vmem_bytes():
    try:
        info = pltpu.get_tpu_info()
        return int(getattr(info, "vmem_capacity_bytes", 64 << 20))
    except Exception:
        return 64 << 20   # conservative (v7x per-core)


def _vmem_usage_bytes(Tb, Bp2, D, Hp, Op):
    fixed = (2 * (D * 4 * Hp + Hp * 4 * Hp + Hp * Hp + Hp * Op) * 2  # bf16 weights (dbl-buf)
             + 2 * (4 * Hp + Hp + Op) * 4                            # f32 biases (dbl-buf)
             + 2 * Bp2 * Hp * 4                                      # h, c scratch
             + 2 * Bp2 * Op * 4)                                     # output block
    per_t = 2 * Bp2 * D * 2 + Bp2 * 4 * Hp * 4                       # x slab (bf16, dbl-buf) + xg_sc (f32)
    return fixed + Tb * per_t, fixed, per_t


def _choose_t_block(T, Bp2, D, Hp, Op, phys_vmem):
    budget = int(phys_vmem * 0.5)          # leave headroom for compiler scratch
    _, fixed, per_t = _vmem_usage_bytes(1, Bp2, D, Hp, Op)
    avail = max(per_t, budget - fixed)
    cap = max(1, min(256, avail // per_t))
    return _largest_divisor_leq(T, cap)


def prepare_kernel_params(p, H, O, Hp, Op):
    """Reorder gates to (i,f,o,g), zero-pad H->Hp / O->Op, transpose, cast bf16."""
    def reorder_pad_gates(w):  # 4H along axis 0, PyTorch order (i, f, g, o)
        i_g, f_g, g_g, o_g = (w[0 * H:1 * H], w[1 * H:2 * H],
                              w[2 * H:3 * H], w[3 * H:4 * H])
        pad = [(0, Hp - H)] + [(0, 0)] * (w.ndim - 1)
        pz = lambda a: jnp.pad(a, pad)
        return jnp.concatenate([pz(i_g), pz(f_g), pz(o_g), pz(g_g)], axis=0)

    w_ih = reorder_pad_gates(p["w_ih"])                         # (4Hp, D)
    w_hh = reorder_pad_gates(p["w_hh"])                         # (4Hp, H)
    b_g = reorder_pad_gates(p["b_ih"] + p["b_hh"])              # (4Hp,)

    w_ih_t = jnp.transpose(w_ih).astype(jnp.bfloat16)           # (D, 4Hp)
    w_hh_t = jnp.pad(jnp.transpose(w_hh),
                     ((0, Hp - H), (0, 0))).astype(jnp.bfloat16)  # (Hp, 4Hp)
    b_gates = b_g[None, :].astype(jnp.float32)                  # (1, 4Hp)

    w1_t = jnp.pad(jnp.transpose(p["w1"]),
                   ((0, Hp - H), (0, Hp - H))).astype(jnp.bfloat16)   # (Hp, Hp)
    b1 = jnp.pad(p["b1"], (0, Hp - H))[None, :].astype(jnp.float32)   # (1, Hp)
    w2_t = jnp.pad(jnp.transpose(p["w2"]),
                   ((0, Hp - H), (0, Op - O))).astype(jnp.bfloat16)   # (Hp, Op)
    b2 = jnp.pad(p["b2"], (0, Op - O))[None, :].astype(jnp.float32)   # (1, Op)
    return w_ih_t, w_hh_t, b_gates, w1_t, b1, w2_t, b2


def generic_rnn_forward(x, raw_params, *, t_block=None):
    """x: (B, T, D) batch-first, like the PyTorch module. Returns (B, O) logits."""
    B, T, D = x.shape
    H = raw_params["w_hh"].shape[1]
    O = raw_params["w2"].shape[0]

    Bp = _round_up(max(B, 8), 8)          # sublane-aligned padded batch
    n_bc = 2 if Bp % 16 == 0 else 1       # batch chunks -> "parallel" axis (v7x 2nd TC)
    Bp2 = Bp // n_bc
    Hp = _round_up(H, 128)                # lane-aligned hidden (whole-vreg gates)
    Op = _round_up(max(O, 128), 128)      # lane-dense output width

    phys_vmem = _physical_vmem_bytes()
    Tb = t_block if t_block is not None else _choose_t_block(T, Bp2, D, Hp, Op, phys_vmem)
    assert T % Tb == 0, "t_block must divide T"
    n_tb = T // Tb

    usage, _, _ = _vmem_usage_bytes(Tb, Bp2, D, Hp, Op)
    vmem_limit = int(min(phys_vmem - (8 << 20), max(32 << 20, usage + (8 << 20))))

    # Time-major + batch pad + bf16 (padding forces one HBM materialization
    # anyway; XLA fuses transpose+pad+cast into it).
    x_tm = jnp.transpose(x, (1, 0, 2))
    if Bp != B:
        x_tm = jnp.pad(x_tm, ((0, 0), (0, Bp - B), (0, 0)))
    x_tm = x_tm.astype(jnp.bfloat16)

    w_ih_t, w_hh_t, b_gates, w1_t, b1, w2_t, b2 = prepare_kernel_params(
        raw_params, H, O, Hp, Op)

    inv = lambda b, i: (0, 0)
    grid_spec = pltpu.PrefetchScalarGridSpec(
        num_scalar_prefetch=0,
        grid=(n_bc, n_tb),
        in_specs=[
            pl.BlockSpec((Tb, Bp2, D), lambda b, i: (i, b, 0)),   # x slab
            pl.BlockSpec((D, 4 * Hp), inv),                       # W_ih^T
            pl.BlockSpec((Hp, 4 * Hp), inv),                      # W_hh^T
            pl.BlockSpec((1, 4 * Hp), inv),                       # b_ih + b_hh
            pl.BlockSpec((Hp, Hp), inv),                          # W1^T
            pl.BlockSpec((1, Hp), inv),                           # b1
            pl.BlockSpec((Hp, Op), inv),                          # W2^T
            pl.BlockSpec((1, Op), inv),                           # b2
        ],
        out_specs=pl.BlockSpec((Bp2, Op), lambda b, i: (b, 0)),
        scratch_shapes=[
            pltpu.VMEM((Bp2, Hp), jnp.float32),            # h state
            pltpu.VMEM((Bp2, Hp), jnp.float32),            # c state
            pltpu.VMEM((Tb, Bp2, 4 * Hp), jnp.float32),    # precomputed x-gate slab
        ],
    )

    out = pl.pallas_call(
        lstm_head_kernel,
        out_shape=jax.ShapeDtypeStruct((Bp, Op), jnp.float32),
        grid_spec=grid_spec,
        compiler_params=pltpu.CompilerParams(
            dimension_semantics=("parallel", "arbitrary"),   # batch ∥, time serial
            vmem_limit_bytes=vmem_limit),
    )(x_tm, w_ih_t, w_hh_t, b_gates, w1_t, b1, w2_t, b2)

    return out[:B, :O]


# ------------------------------ reference -----------------------------------

def reference_forward(x, p):
    """Pure-JAX f32 reference matching PyTorch LSTM + fc head (eval mode)."""
    B, T, D = x.shape
    H = p["w_hh"].shape[1]
    w_ih_t, w_hh_t = p["w_ih"].T, p["w_hh"].T
    b = (p["b_ih"] + p["b_hh"])[None, :]

    def step(carry, x_t):
        h, c = carry
        gates = x_t @ w_ih_t + h @ w_hh_t + b
        i_g = jax.nn.sigmoid(gates[:, 0 * H:1 * H])
        f_g = jax.nn.sigmoid(gates[:, 1 * H:2 * H])
        g_g = jnp.tanh(gates[:, 2 * H:3 * H])
        o_g = jax.nn.sigmoid(gates[:, 3 * H:4 * H])
        c = f_g * c + i_g * g_g
        h = o_g * jnp.tanh(c)
        return (h, c), None

    h0 = jnp.zeros((B, H), jnp.float32)
    (h, _), _ = jax.lax.scan(step, (h0, h0), jnp.transpose(x, (1, 0, 2)))
    hid = jnp.maximum(h @ p["w1"].T + p["b1"][None, :], 0.0)
    return hid @ p["w2"].T + p["b2"][None, :]


def make_params(key, D, H, O):
    """Deterministic init mirroring PyTorch layouts (raw, un-transposed)."""
    ks = jax.random.split(key, 8)
    s = 1.0 / np.sqrt(H)
    u = lambda k, shape, sc: jax.random.uniform(k, shape, jnp.float32, -sc, sc)
    return {
        "w_ih": u(ks[0], (4 * H, D), s),   # weight_ih_l0, gate order i,f,g,o
        "w_hh": u(ks[1], (4 * H, H), s),   # weight_hh_l0
        "b_ih": u(ks[2], (4 * H,), s),
        "b_hh": u(ks[3], (4 * H,), s),
        "w1": u(ks[4], (H, H), s),         # fc1.weight
        "b1": u(ks[5], (H,), s),
        "w2": u(ks[6], (O, H), s),         # fc2.weight
        "b2": u(ks[7], (O,), s),
    }


if __name__ == "__main__":
    B, T, D, H, O = 2, 8, 16, 32, 10
    key = jax.random.PRNGKey(0)
    kx, kp = jax.random.split(key)
    x = jax.random.normal(kx, (B, T, D), jnp.float32)
    params = make_params(kp, D, H, O)

    y = generic_rnn_forward(x, params)
    jax.block_until_ready(y)

    y_ref = reference_forward(x, params)
    # bf16 MXU operands -> loosened tolerance (review item #2).
    np.testing.assert_allclose(np.asarray(y), np.asarray(y_ref), rtol=2e-2, atol=2e-2)
    print("KERNEL_OK")
</pallas_src>

<mosaic_0001>
module attributes {stable_mosaic.version = 11 : i64} {
  func.func @lstm_head_kernel(%arg0: i32, %arg1: i32, %arg2: memref<8x8x16xbf16, #tpu.memory_space<vmem>>, %arg3: memref<16x512xbf16, #tpu.memory_space<vmem>>, %arg4: memref<128x512xbf16, #tpu.memory_space<vmem>>, %arg5: memref<1x512xf32, #tpu.memory_space<vmem>>, %arg6: memref<128x128xbf16, #tpu.memory_space<vmem>>, %arg7: memref<1x128xf32, #tpu.memory_space<vmem>>, %arg8: memref<128x128xbf16, #tpu.memory_space<vmem>>, %arg9: memref<1x128xf32, #tpu.memory_space<vmem>>, %arg10: memref<8x128xf32, #tpu.memory_space<vmem>>, %arg11: memref<8x128xf32, #tpu.memory_space<vmem>>, %arg12: memref<8x128xf32, #tpu.memory_space<vmem>>, %arg13: memref<8x8x512xf32, #tpu.memory_space<vmem>>) attributes {dimension_semantics = [#tpu.dimension_semantics<parallel>, #tpu.dimension_semantics<arbitrary>], iteration_bounds = array<i64: 1, 1>, scalar_prefetch = 0 : i64, scratch_operands = 3 : i64, tpu.core_type = #tpu.core_type<tc>, window_params = [{transform_indices = @transform_0, window_bounds = array<i64: 8, 8, 16>}, {pipeline_mode = #tpu.pipeline_mode<synchronous>, transform_indices = @transform_1, window_bounds = array<i64: 16, 512>}, {pipeline_mode = #tpu.pipeline_mode<synchronous>, transform_indices = @transform_2, window_bounds = array<i64: 128, 512>}, {pipeline_mode = #tpu.pipeline_mode<synchronous>, transform_indices = @transform_3, window_bounds = array<i64: 1, 512>}, {pipeline_mode = #tpu.pipeline_mode<synchronous>, transform_indices = @transform_4, window_bounds = array<i64: 128, 128>}, {pipeline_mode = #tpu.pipeline_mode<synchronous>, transform_indices = @transform_5, window_bounds = array<i64: 1, 128>}, {pipeline_mode = #tpu.pipeline_mode<synchronous>, transform_indices = @transform_6, window_bounds = array<i64: 128, 128>}, {pipeline_mode = #tpu.pipeline_mode<synchronous>, transform_indices = @transform_7, window_bounds = array<i64: 1, 128>}, {transform_indices = @transform_8, window_bounds = array<i64: 8, 128>}]} {
    %c0_i32 = arith.constant 0 : i32
    %0 = arith.cmpi eq, %arg1, %c0_i32 : i32
    %1 = arith.extui %0 : i1 to i32
    %c0_i32_0 = arith.constant 0 : i32
    %2 = arith.cmpi ne, %1, %c0_i32_0 : i32
    scf.if %2 {
      %cst_55 = arith.constant 0.000000e+00 : f32
      %196 = vector.broadcast %cst_55 : f32 to vector<8x128xf32>
      %c0_56 = arith.constant 0 : index
      %c0_57 = arith.constant 0 : index
      %197 = vector.load %arg11[%c0_56, %c0_57] : memref<8x128xf32, #tpu.memory_space<vmem>>, vector<8x128xf32>
      tpu.vector_store %arg11[%c0_56, %c0_57], %196 {strides = array<i32>} : memref<8x128xf32, #tpu.memory_space<vmem>>, vector<8x128xf32>,
      %cst_58 = arith.constant 0.000000e+00 : f32
      %198 = vector.broadcast %cst_58 : f32 to vector<8x128xf32>
      %c0_59 = arith.constant 0 : index
      %c0_60 = arith.constant 0 : index
      %199 = vector.load %arg12[%c0_59, %c0_60] : memref<8x128xf32, #tpu.memory_space<vmem>>, vector<8x128xf32>
      tpu.vector_store %arg12[%c0_59, %c0_60], %198 {strides = array<i32>} : memref<8x128xf32, #tpu.memory_space<vmem>>, vector<8x128xf32>,
    } else {
    }
    %c0 = arith.constant 0 : index
    %c0_1 = arith.constant 0 : index
    %c0_2 = arith.constant 0 : index
    %3 = vector.load %arg2[%c0, %c0_1, %c0_2] : memref<8x8x16xbf16, #tpu.memory_space<vmem>>, vector<8x8x16xbf16>
    %4 = vector.shape_cast %3 : vector<8x8x16xbf16> to vector<64x16xbf16>
    %c0_3 = arith.constant 0 : index
    %c0_4 = arith.constant 0 : index
    %5 = vector.load %arg3[%c0_3, %c0_4] : memref<16x512xbf16, #tpu.memory_space<vmem>>, vector<16x512xbf16>
    %cst = arith.constant dense<0.000000e+00> : vector<64x512xf32>
    %6 = tpu.matmul %4, %5, %cst {dimension_numbers = #tpu.dot_dimension_numbers<[1], [0], [0], [1], [0, 0, 1, 1], [], []>} : vector<64x16xbf16>, vector<16x512xbf16>, vector<64x512xf32> -> vector<64x512xf32>
    %c0_5 = arith.constant 0 : index
    %c0_6 = arith.constant 0 : index
    %7 = vector.load %arg5[%c0_5, %c0_6] : memref<1x512xf32, #tpu.memory_space<vmem>>, vector<1x512xf32>
    %8 = vector.broadcast %7 : vector<1x512xf32> to vector<64x512xf32>
    %9 = arith.addf %6, %8 : vector<64x512xf32>
    %10 = vector.shape_cast %9 : vector<64x512xf32> to vector<8x8x512xf32>
    %c0_7 = arith.constant 0 : index
    %c0_8 = arith.constant 0 : index
    %c0_9 = arith.constant 0 : index
    %11 = vector.load %arg13[%c0_7, %c0_8, %c0_9] : memref<8x8x512xf32, #tpu.memory_space<vmem>>, vector<8x8x512xf32>
    tpu.vector_store %arg13[%c0_7, %c0_8, %c0_9], %10 {strides = array<i32>} : memref<8x8x512xf32, #tpu.memory_space<vmem>>, vector<8x8x512xf32>,
    %c0_10 = arith.constant 0 : index
    %c0_11 = arith.constant 0 : index
    %12 = vector.load %arg4[%c0_10, %c0_11] : memref<128x512xbf16, #tpu.memory_space<vmem>>, vector<128x512xbf16>
    %c0_12 = arith.constant 0 : index
    %c0_13 = arith.constant 0 : index
    %13 = vector.load %arg11[%c0_12, %c0_13] : memref<8x128xf32, #tpu.memory_space<vmem>>, vector<8x128xf32>
    %c0_14 = arith.constant 0 : index
    %c0_15 = arith.constant 0 : index
    %14 = vector.load %arg12[%c0_14, %c0_15] : memref<8x128xf32, #tpu.memory_space<vmem>>, vector<8x128xf32>
    %c0_i32_16 = arith.constant 0 : i32
    %15 = arith.index_cast %c0_i32_16 : i32 to index
    %c0_17 = arith.constant 0 : index
    %c0_18 = arith.constant 0 : index
    %16 = vector.load %arg13[%15, %c0_17, %c0_18] : memref<8x8x512xf32, #tpu.memory_space<vmem>>, vector<1x8x512xf32>
    %17 = vector.shape_cast %16 : vector<1x8x512xf32> to vector<8x512xf32>
    %18 = arith.truncf %13 : vector<8x128xf32> to vector<8x128xbf16>
    %cst_19 = arith.constant dense<0.000000e+00> : vector<8x512xf32>
    %19 = tpu.matmul %18, %12, %cst_19 {dimension_numbers = #tpu.dot_dimension_numbers<[1], [0], [0], [1], [0, 0, 1, 1], [], []>} : vector<8x128xbf16>, vector<128x512xbf16>, vector<8x512xf32> -> vector<8x512xf32>
    %20 = arith.addf %17, %19 : vector<8x512xf32>
    %21 = vector.extract_strided_slice %20 {offsets = [0, 0], sizes = [8, 384], strides = [1, 1]} : vector<8x512xf32> to vector<8x384xf32>
    %22 = arith.negf %21 : vector<8x384xf32>
    %23 = math.exp %22 : vector<8x384xf32>
    %cst_20 = arith.constant 1.000000e+00 : f32
    %24 = vector.broadcast %cst_20 : f32 to vector<8x384xf32>
    %25 = arith.addf %24, %23 : vector<8x384xf32>
    %26 = arith.divf %24, %25 : vector<8x384xf32>
    %27 = vector.extract_strided_slice %20 {offsets = [0, 384], sizes = [8, 128], strides = [1, 1]} : vector<8x512xf32> to vector<8x128xf32>
    %28 = math.tanh %27 : vector<8x128xf32>
    %29 = vector.extract_strided_slice %26 {offsets = [0, 0], sizes = [8, 128], strides = [1, 1]} : vector<8x384xf32> to vector<8x128xf32>
    %30 = vector.extract_strided_slice %26 {offsets = [0, 128], sizes = [8, 128], strides = [1, 1]} : vector<8x384xf32> to vector<8x128xf32>
    %31 = vector.extract_strided_slice %26 {offsets = [0, 256], sizes = [8, 128], strides = [1, 1]} : vector<8x384xf32> to vector<8x128xf32>
    %32 = arith.mulf %30, %14 : vector<8x128xf32>
    %33 = arith.mulf %29, %28 : vector<8x128xf32>
    %34 = arith.addf %32, %33 : vector<8x128xf32>
    %35 = math.tanh %34 : vector<8x128xf32>
    %36 = arith.mulf %31, %35 : vector<8x128xf32>
    %c1_i32 = arith.constant 1 : i32
    %37 = arith.index_cast %c1_i32 : i32 to index
    %c0_21 = arith.constant 0 : index
    %c0_22 = arith.constant 0 : index
    %38 = vector.load %arg13[%37, %c0_21, %c0_22] : memref<8x8x512xf32, #tpu.memory_space<vmem>>, vector<1x8x512xf32>
    %39 = vector.shape_cast %38 : vector<1x8x512xf32> to vector<8x512xf32>
    %40 = arith.truncf %36 : vector<8x128xf32> to vector<8x128xbf16>
    %cst_23 = arith.constant dense<0.000000e+00> : vector<8x512xf32>
    %41 = tpu.matmul %40, %12, %cst_23 {dimension_numbers = #tpu.dot_dimension_numbers<[1], [0], [0], [1], [0, 0, 1, 1], [], []>} : vector<8x128xbf16>, vector<128x512xbf16>, vector<8x512xf32> -> vector<8x512xf32>
    %42 = arith.addf %39, %41 : vector<8x512xf32>
    %43 = vector.extract_strided_slice %42 {offsets = [0, 0], sizes = [8, 384], strides = [1, 1]} : vector<8x512xf32> to vector<8x384xf32>
    %44 = arith.negf %43 : vector<8x384xf32>
    %45 = math.exp %44 : vector<8x384xf32>
    %cst_24 = arith.constant 1.000000e+00 : f32
    %46 = vector.broadcast %cst_24 : f32 to vector<8x384xf32>
    %47 = arith.addf %46, %45 : vector<8x384xf32>
    %48 = arith.divf %46, %47 : vector<8x384xf32>
    %49 = vector.extract_strided_slice %42 {offsets = [0, 384], sizes = [8, 128], strides = [1, 1]} : vector<8x512xf32> to vector<8x128xf32>
    %50 = math.tanh %49 : vector<8x128xf32>
    %51 = vector.extract_strided_slice %48 {offsets = [0, 0], sizes = [8, 128], strides = [1, 1]} : vector<8x384xf32> to vector<8x128xf32>
    %52 = vector.extract_strided_slice %48 {offsets = [0, 128], sizes = [8, 128], strides = [1, 1]} : vector<8x384xf32> to vector<8x128xf32>
    %53 = vector.extract_strided_slice %48 {offsets = [0, 256], sizes = [8, 128], strides = [1, 1]} : vector<8x384xf32> to vector<8x128xf32>
    %54 = arith.mulf %52, %34 : vector<8x128xf32>
    %55 = arith.mulf %51, %50 : vector<8x128xf32>
    %56 = arith.addf %54, %55 : vector<8x128xf32>
    %57 = math.tanh %56 : vector<8x128xf32>
    %58 = arith.mulf %53, %57 : vector<8x128xf32>
    %c2_i32 = arith.constant 2 : i32
    %59 = arith.index_cast %c2_i32 : i32 to index
    %c0_25 = arith.constant 0 : index
    %c0_26 = arith.constant 0 : index
    %60 = vector.load %arg13[%59, %c0_25, %c0_26] : memref<8x8x512xf32, #tpu.memory_space<vmem>>, vector<1x8x512xf32>
    %61 = vector.shape_cast %60 : vector<1x8x512xf32> to vector<8x512xf32>
    %62 = arith.truncf %58 : vector<8x128xf32> to vector<8x128xbf16>
    %cst_27 = arith.constant dense<0.000000e+00> : vector<8x512xf32>
    %63 = tpu.matmul %62, %12, %cst_27 {dimension_numbers = #tpu.dot_dimension_numbers<[1], [0], [0], [1], [0, 0, 1, 1], [], []>} : vector<8x128xbf16>, vector<128x512xbf16>, vector<8x512xf32> -> vector<8x512xf32>
    %64 = arith.addf %61, %63 : vector<8x512xf32>
    %65 = vector.extract_strided_slice %64 {offsets = [0, 0], sizes = [8, 384], strides = [1, 1]} : vector<8x512xf32> to vector<8x384xf32>
    %66 = arith.negf %65 : vector<8x384xf32>
    %67 = math.exp %66 : vector<8x384xf32>
    %cst_28 = arith.constant 1.000000e+00 : f32
    %68 = vector.broadcast %cst_28 : f32 to vector<8x384xf32>
    %69 = arith.addf %68, %67 : vector<8x384xf32>
    %70 = arith.divf %68, %69 : vector<8x384xf32>
    %71 = vector.extract_strided_slice %64 {offsets = [0, 384], sizes = [8, 128], strides = [1, 1]} : vector<8x512xf32> to vector<8x128xf32>
    %72 = math.tanh %71 : vector<8x128xf32>
    %73 = vector.extract_strided_slice %70 {offsets = [0, 0], sizes = [8, 128], strides = [1, 1]} : vector<8x384xf32> to vector<8x128xf32>
    %74 = vector.extract_strided_slice %70 {offsets = [0, 128], sizes = [8, 128], strides = [1, 1]} : vector<8x384xf32> to vector<8x128xf32>
    %75 = vector.extract_strided_slice %70 {offsets = [0, 256], sizes = [8, 128], strides = [1, 1]} : vector<8x384xf32> to vector<8x128xf32>
    %76 = arith.mulf %74, %56 : vector<8x128xf32>
    %77 = arith.mulf %73, %72 : vector<8x128xf32>
    %78 = arith.addf %76, %77 : vector<8x128xf32>
    %79 = math.tanh %78 : vector<8x128xf32>
    %80 = arith.mulf %75, %79 : vector<8x128xf32>
    %c3_i32 = arith.constant 3 : i32
    %81 = arith.index_cast %c3_i32 : i32 to index
    %c0_29 = arith.constant 0 : index
    %c0_30 = arith.constant 0 : index
    %82 = vector.load %arg13[%81, %c0_29, %c0_30] : memref<8x8x512xf32, #tpu.memory_space<vmem>>, vector<1x8x512xf32>
    %83 = vector.shape_cast %82 : vector<1x8x512xf32> to vector<8x512xf32>
    %84 = arith.truncf %80 : vector<8x128xf32> to vector<8x128xbf16>
    %cst_31 = arith.constant dense<0.000000e+00> : vector<8x512xf32>
    %85 = tpu.matmul %84, %12, %cst_31 {dimension_numbers = #tpu.dot_dimension_numbers<[1], [0], [0], [1], [0, 0, 1, 1], [], []>} : vector<8x128xbf16>, vector<128x512xbf16>, vector<8x512xf32> -> vector<8x512xf32>
    %86 = arith.addf %83, %85 : vector<8x512xf32>
    %87 = vector.extract_strided_slice %86 {offsets = [0, 0], sizes = [8, 384], strides = [1, 1]} : vector<8x512xf32> to vector<8x384xf32>
    %88 = arith.negf %87 : vector<8x384xf32>
    %89 = math.exp %88 : vector<8x384xf32>
    %cst_32 = arith.constant 1.000000e+00 : f32
    %90 = vector.broadcast %cst_32 : f32 to vector<8x384xf32>
    %91 = arith.addf %90, %89 : vector<8x384xf32>
    %92 = arith.divf %90, %91 : vector<8x384xf32>
    %93 = vector.extract_strided_slice %86 {offsets = [0, 384], sizes = [8, 128], strides = [1, 1]} : vector<8x512xf32> to vector<8x128xf32>
    %94 = math.tanh %93 : vector<8x128xf32>
    %95 = vector.extract_strided_slice %92 {offsets = [0, 0], sizes = [8, 128], strides = [1, 1]} : vector<8x384xf32> to vector<8x128xf32>
    %96 = vector.extract_strided_slice %92 {offsets = [0, 128], sizes = [8, 128], strides = [1, 1]} : vector<8x384xf32> to vector<8x128xf32>
    %97 = vector.extract_strided_slice %92 {offsets = [0, 256], sizes = [8, 128], strides = [1, 1]} : vector<8x384xf32> to vector<8x128xf32>
    %98 = arith.mulf %96, %78 : vector<8x128xf32>
    %99 = arith.mulf %95, %94 : vector<8x128xf32>
    %100 = arith.addf %98, %99 : vector<8x128xf32>
    %101 = math.tanh %100 : vector<8x128xf32>
    %102 = arith.mulf %97, %101 : vector<8x128xf32>
    %c4_i32 = arith.constant 4 : i32
    %103 = arith.index_cast %c4_i32 : i32 to index
    %c0_33 = arith.constant 0 : index
    %c0_34 = arith.constant 0 : index
    %104 = vector.load %arg13[%103, %c0_33, %c0_34] : memref<8x8x512xf32, #tpu.memory_space<vmem>>, vector<1x8x512xf32>
    %105 = vector.shape_cast %104 : vector<1x8x512xf32> to vector<8x512xf32>
    %106 = arith.truncf %102 : vector<8x128xf32> to vector<8x128xbf16>
    %cst_35 = arith.constant dense<0.000000e+00> : vector<8x512xf32>
    %107 = tpu.matmul %106, %12, %cst_35 {dimension_numbers = #tpu.dot_dimension_numbers<[1], [0], [0], [1], [0, 0, 1, 1], [], []>} : vector<8x128xbf16>, vector<128x512xbf16>, vector<8x512xf32> -> vector<8x512xf32>
    %108 = arith.addf %105, %107 : vector<8x512xf32>
    %109 = vector.extract_strided_slice %108 {offsets = [0, 0], sizes = [8, 384], strides = [1, 1]} : vector<8x512xf32> to vector<8x384xf32>
    %110 = arith.negf %109 : vector<8x384xf32>
    %111 = math.exp %110 : vector<8x384xf32>
    %cst_36 = arith.constant 1.000000e+00 : f32
    %112 = vector.broadcast %cst_36 : f32 to vector<8x384xf32>
    %113 = arith.addf %112, %111 : vector<8x384xf32>
    %114 = arith.divf %112, %113 : vector<8x384xf32>
    %115 = vector.extract_strided_slice %108 {offsets = [0, 384], sizes = [8, 128], strides = [1, 1]} : vector<8x512xf32> to vector<8x128xf32>
    %116 = math.tanh %115 : vector<8x128xf32>
    %117 = vector.extract_strided_slice %114 {offsets = [0, 0], sizes = [8, 128], strides = [1, 1]} : vector<8x384xf32> to vector<8x128xf32>
    %118 = vector.extract_strided_slice %114 {offsets = [0, 128], sizes = [8, 128], strides = [1, 1]} : vector<8x384xf32> to vector<8x128xf32>
    %119 = vector.extract_strided_slice %114 {offsets = [0, 256], sizes = [8, 128], strides = [1, 1]} : vector<8x384xf32> to vector<8x128xf32>
    %120 = arith.mulf %118, %100 : vector<8x128xf32>
    %121 = arith.mulf %117, %116 : vector<8x128xf32>
    %122 = arith.addf %120, %121 : vector<8x128xf32>
    %123 = math.tanh %122 : vector<8x128xf32>
    %124 = arith.mulf %119, %123 : vector<8x128xf32>
    %c5_i32 = arith.constant 5 : i32
    %125 = arith.index_cast %c5_i32 : i32 to index
    %c0_37 = arith.constant 0 : index
    %c0_38 = arith.constant 0 : index
    %126 = vector.load %arg13[%125, %c0_37, %c0_38] : memref<8x8x512xf32, #tpu.memory_space<vmem>>, vector<1x8x512xf32>
    %127 = vector.shape_cast %126 : vector<1x8x512xf32> to vector<8x512xf32>
    %128 = arith.truncf %124 : vector<8x128xf32> to vector<8x128xbf16>
    %cst_39 = arith.constant dense<0.000000e+00> : vector<8x512xf32>
    %129 = tpu.matmul %128, %12, %cst_39 {dimension_numbers = #tpu.dot_dimension_numbers<[1], [0], [0], [1], [0, 0, 1, 1], [], []>} : vector<8x128xbf16>, vector<128x512xbf16>, vector<8x512xf32> -> vector<8x512xf32>
    %130 = arith.addf %127, %129 : vector<8x512xf32>
    %131 = vector.extract_strided_slice %130 {offsets = [0, 0], sizes = [8, 384], strides = [1, 1]} : vector<8x512xf32> to vector<8x384xf32>
    %132 = arith.negf %131 : vector<8x384xf32>
    %133 = math.exp %132 : vector<8x384xf32>
    %cst_40 = arith.constant 1.000000e+00 : f32
    %134 = vector.broadcast %cst_40 : f32 to vector<8x384xf32>
    %135 = arith.addf %134, %133 : vector<8x384xf32>
    %136 = arith.divf %134, %135 : vector<8x384xf32>
    %137 = vector.extract_strided_slice %130 {offsets = [0, 384], sizes = [8, 128], strides = [1, 1]} : vector<8x512xf32> to vector<8x128xf32>
    %138 = math.tanh %137 : vector<8x128xf32>
    %139 = vector.extract_strided_slice %136 {offsets = [0, 0], sizes = [8, 128], strides = [1, 1]} : vector<8x384xf32> to vector<8x128xf32>
    %140 = vector.extract_strided_slice %136 {offsets = [0, 128], sizes = [8, 128], strides = [1, 1]} : vector<8x384xf32> to vector<8x128xf32>
    %141 = vector.extract_strided_slice %136 {offsets = [0, 256], sizes = [8, 128], strides = [1, 1]} : vector<8x384xf32> to vector<8x128xf32>
    %142 = arith.mulf %140, %122 : vector<8x128xf32>
    %143 = arith.mulf %139, %138 : vector<8x128xf32>
    %144 = arith.addf %142, %143 : vector<8x128xf32>
    %145 = math.tanh %144 : vector<8x128xf32>
    %146 = arith.mulf %141, %145 : vector<8x128xf32>
    %c6_i32 = arith.constant 6 : i32
    %147 = arith.index_cast %c6_i32 : i32 to index
    %c0_41 = arith.constant 0 : index
    %c0_42 = arith.constant 0 : index
    %148 = vector.load %arg13[%147, %c0_41, %c0_42] : memref<8x8x512xf32, #tpu.memory_space<vmem>>, vector<1x8x512xf32>
    %149 = vector.shape_cast %148 : vector<1x8x512xf32> to vector<8x512xf32>
    %150 = arith.truncf %146 : vector<8x128xf32> to vector<8x128xbf16>
    %cst_43 = arith.constant dense<0.000000e+00> : vector<8x512xf32>
    %151 = tpu.matmul %150, %12, %cst_43 {dimension_numbers = #tpu.dot_dimension_numbers<[1], [0], [0], [1], [0, 0, 1, 1], [], []>} : vector<8x128xbf16>, vector<128x512xbf16>, vector<8x512xf32> -> vector<8x512xf32>
    %152 = arith.addf %149, %151 : vector<8x512xf32>
    %153 = vector.extract_strided_slice %152 {offsets = [0, 0], sizes = [8, 384], strides = [1, 1]} : vector<8x512xf32> to vector<8x384xf32>
    %154 = arith.negf %153 : vector<8x384xf32>
    %155 = math.exp %154 : vector<8x384xf32>
    %cst_44 = arith.constant 1.000000e+00 : f32
    %156 = vector.broadcast %cst_44 : f32 to vector<8x384xf32>
    %157 = arith.addf %156, %155 : vector<8x384xf32>
    %158 = arith.divf %156, %157 : vector<8x384xf32>
    %159 = vector.extract_strided_slice %152 {offsets = [0, 384], sizes = [8, 128], strides = [1, 1]} : vector<8x512xf32> to vector<8x128xf32>
    %160 = math.tanh %159 : vector<8x128xf32>
    %161 = vector.extract_strided_slice %158 {offsets = [0, 0], sizes = [8, 128], strides = [1, 1]} : vector<8x384xf32> to vector<8x128xf32>
    %162 = vector.extract_strided_slice %158 {offsets = [0, 128], sizes = [8, 128], strides = [1, 1]} : vector<8x384xf32> to vector<8x128xf32>
    %163 = vector.extract_strided_slice %158 {offsets = [0, 256], sizes = [8, 128], strides = [1, 1]} : vector<8x384xf32> to vector<8x128xf32>
    %164 = arith.mulf %162, %144 : vector<8x128xf32>
    %165 = arith.mulf %161, %160 : vector<8x128xf32>
    %166 = arith.addf %164, %165 : vector<8x128xf32>
    %167 = math.tanh %166 : vector<8x128xf32>
    %168 = arith.mulf %163, %167 : vector<8x128xf32>
    %c7_i32 = arith.constant 7 : i32
    %169 = arith.index_cast %c7_i32 : i32 to index
    %c0_45 = arith.constant 0 : index
    %c0_46 = arith.constant 0 : index
    %170 = vector.load %arg13[%169, %c0_45, %c0_46] : memref<8x8x512xf32, #tpu.memory_space<vmem>>, vector<1x8x512xf32>
    %171 = vector.shape_cast %170 : vector<1x8x512xf32> to vector<8x512xf32>
    %172 = arith.truncf %168 : vector<8x128xf32> to vector<8x128xbf16>
    %cst_47 = arith.constant dense<0.000000e+00> : vector<8x512xf32>
    %173 = tpu.matmul %172, %12, %cst_47 {dimension_numbers = #tpu.dot_dimension_numbers<[1], [0], [0], [1], [0, 0, 1, 1], [], []>} : vector<8x128xbf16>, vector<128x512xbf16>, vector<8x512xf32> -> vector<8x512xf32>
    %174 = arith.addf %171, %173 : vector<8x512xf32>
    %175 = vector.extract_strided_slice %174 {offsets = [0, 0], sizes = [8, 384], strides = [1, 1]} : vector<8x512xf32> to vector<8x384xf32>
    %176 = arith.negf %175 : vector<8x384xf32>
    %177 = math.exp %176 : vector<8x384xf32>
    %cst_48 = arith.constant 1.000000e+00 : f32
    %178 = vector.broadcast %cst_48 : f32 to vector<8x384xf32>
    %179 = arith.addf %178, %177 : vector<8x384xf32>
    %180 = arith.divf %178, %179 : vector<8x384xf32>
    %181 = vector.extract_strided_slice %174 {offsets = [0, 384], sizes = [8, 128], strides = [1, 1]} : vector<8x512xf32> to vector<8x128xf32>
    %182 = math.tanh %181 : vector<8x128xf32>
    %183 = vector.extract_strided_slice %180 {offsets = [0, 0], sizes = [8, 128], strides = [1, 1]} : vector<8x384xf32> to vector<8x128xf32>
    %184 = vector.extract_strided_slice %180 {offsets = [0, 128], sizes = [8, 128], strides = [1, 1]} : vector<8x384xf32> to vector<8x128xf32>
    %185 = vector.extract_strided_slice %180 {offsets = [0, 256], sizes = [8, 128], strides = [1, 1]} : vector<8x384xf32> to vector<8x128xf32>
    %186 = arith.mulf %184, %166 : vector<8x128xf32>
    %187 = arith.mulf %183, %182 : vector<8x128xf32>
    %188 = arith.addf %186, %187 : vector<8x128xf32>
    %189 = math.tanh %188 : vector<8x128xf32>
    %190 = arith.mulf %185, %189 : vector<8x128xf32>
    %c8_i32 = arith.constant 8 : i32
    %c0_49 = arith.constant 0 : index
    %c0_50 = arith.constant 0 : index
    %191 = vector.load %arg11[%c0_49, %c0_50] : memref<8x128xf32, #tpu.memory_space<vmem>>, vector<8x128xf32>
    tpu.vector_store %arg11[%c0_49, %c0_50], %190 {strides = array<i32>} : memref<8x128xf32, #tpu.memory_space<vmem>>, vector<8x128xf32>,
    %c0_51 = arith.constant 0 : index
    %c0_52 = arith.constant 0 : index
    %192 = vector.load %arg12[%c0_51, %c0_52] : memref<8x128xf32, #tpu.memory_space<vmem>>, vector<8x128xf32>
    tpu.vector_store %arg12[%c0_51, %c0_52], %188 {strides = array<i32>} : memref<8x128xf32, #tpu.memory_space<vmem>>, vector<8x128xf32>,
    %c0_i32_53 = arith.constant 0 : i32
    %193 = arith.cmpi eq, %arg1, %c0_i32_53 : i32
    %194 = arith.extui %193 : i1 to i32
    %c0_i32_54 = arith.constant 0 : i32
    %195 = arith.cmpi ne, %194, %c0_i32_54 : i32
    scf.if %195 {
      %196 = arith.truncf %190 : vector<8x128xf32> to vector<8x128xbf16>
      %c0_55 = arith.constant 0 : index
      %c0_56 = arith.constant 0 : index
      %197 = vector.load %arg6[%c0_55, %c0_56] : memref<128x128xbf16, #tpu.memory_space<vmem>>, vector<128x128xbf16>
      %cst_57 = arith.constant dense<0.000000e+00> : vector<8x128xf32>
      %198 = tpu.matmul %196, %197, %cst_57 {dimension_numbers = #tpu.dot_dimension_numbers<[1], [0], [0], [1], [0, 0, 1, 1], [], []>} : vector<8x128xbf16>, vector<128x128xbf16>, vector<8x128xf32> -> vector<8x128xf32>
      %c0_58 = arith.constant 0 : index
      %c0_59 = arith.constant 0 : index
      %199 = vector.load %arg7[%c0_58, %c0_59] : memref<1x128xf32, #tpu.memory_space<vmem>>, vector<1x128xf32>
      %200 = vector.broadcast %199 : vector<1x128xf32> to vector<8x128xf32>
      %201 = arith.addf %198, %200 : vector<8x128xf32>
      %cst_60 = arith.constant 0.000000e+00 : f32
      %202 = vector.broadcast %cst_60 : f32 to vector<8x128xf32>
      %203 = arith.maximumf %201, %202 : vector<8x128xf32>
      %204 = arith.truncf %203 : vector<8x128xf32> to vector<8x128xbf16>
      %c0_61 = arith.constant 0 : index
      %c0_62 = arith.constant 0 : index
      %205 = vector.load %arg8[%c0_61, %c0_62] : memref<128x128xbf16, #tpu.memory_space<vmem>>, vector<128x128xbf16>
      %cst_63 = arith.constant dense<0.000000e+00> : vector<8x128xf32>
      %206 = tpu.matmul %204, %205, %cst_63 {dimension_numbers = #tpu.dot_dimension_numbers<[1], [0], [0], [1], [0, 0, 1, 1], [], []>} : vector<8x128xbf16>, vector<128x128xbf16>, vector<8x128xf32> -> vector<8x128xf32>
      %c0_64 = arith.constant 0 : index
      %c0_65 = arith.constant 0 : index
      %207 = vector.load %arg9[%c0_64, %c0_65] : memref<1x128xf32, #tpu.memory_space<vmem>>, vector<1x128xf32>
      %208 = vector.broadcast %207 : vector<1x128xf32> to vector<8x128xf32>
      %209 = arith.addf %206, %208 : vector<8x128xf32>
      %c0_66 = arith.constant 0 : index
      %c0_67 = arith.constant 0 : index
      %210 = vector.load %arg10[%c0_66, %c0_67] : memref<8x128xf32, #tpu.memory_space<vmem>>, vector<8x128xf32>
      tpu.vector_store %arg10[%c0_66, %c0_67], %209 {strides = array<i32>} : memref<8x128xf32, #tpu.memory_space<vmem>>, vector<8x128xf32>,
    } else {
    }
    return
  }
  func.func @transform_0(%arg0: i32, %arg1: i32) -> (i32, i32, i32) {
    %c0_i32 = arith.constant 0 : i32
    %c0_i32_0 = arith.constant 0 : i32
    return %arg1, %arg0, %c0_i32 : i32, i32, i32
  }
  func.func @transform_1(%arg0: i32, %arg1: i32) -> (i32, i32) {
    %c0_i32 = arith.constant 0 : i32
    %c0_i32_0 = arith.constant 0 : i32
    %c0_i32_1 = arith.constant 0 : i32
    return %c0_i32, %c0_i32_0 : i32, i32
  }
  func.func @transform_2(%arg0: i32, %arg1: i32) -> (i32, i32) {
    %c0_i32 = arith.constant 0 : i32
    %c0_i32_0 = arith.constant 0 : i32
    %c0_i32_1 = arith.constant 0 : i32
    return %c0_i32, %c0_i32_0 : i32, i32
  }
  func.func @transform_3(%arg0: i32, %arg1: i32) -> (i32, i32) {
    %c0_i32 = arith.constant 0 : i32
    %c0_i32_0 = arith.constant 0 : i32
    %c0_i32_1 = arith.constant 0 : i32
    return %c0_i32, %c0_i32_0 : i32, i32
  }
  func.func @transform_4(%arg0: i32, %arg1: i32) -> (i32, i32) {
    %c0_i32 = arith.constant 0 : i32
    %c0_i32_0 = arith.constant 0 : i32
    %c0_i32_1 = arith.constant 0 : i32
    return %c0_i32, %c0_i32_0 : i32, i32
  }
  func.func @transform_5(%arg0: i32, %arg1: i32) -> (i32, i32) {
    %c0_i32 = arith.constant 0 : i32
    %c0_i32_0 = arith.constant 0 : i32
    %c0_i32_1 = arith.constant 0 : i32
    return %c0_i32, %c0_i32_0 : i32, i32
  }
  func.func @transform_6(%arg0: i32, %arg1: i32) -> (i32, i32) {
    %c0_i32 = arith.constant 0 : i32
    %c0_i32_0 = arith.constant 0 : i32
    %c0_i32_1 = arith.constant 0 : i32
    return %c0_i32, %c0_i32_0 : i32, i32
  }
  func.func @transform_7(%arg0: i32, %arg1: i32) -> (i32, i32) {
    %c0_i32 = arith.constant 0 : i32
    %c0_i32_0 = arith.constant 0 : i32
    %c0_i32_1 = arith.constant 0 : i32
    return %c0_i32, %c0_i32_0 : i32, i32
  }
  func.func @transform_8(%arg0: i32, %arg1: i32) -> (i32, i32) {
    %c0_i32 = arith.constant 0 : i32
    %c0_i32_0 = arith.constant 0 : i32
    return %arg0, %c0_i32 : i32, i32
  }
}

</mosaic_0001>

<llo_original>
// kernel: tpu_custom_call.1
$region0: #{tpu_custom_call.1}
  #allocation0 [shape = 'u32[]', space=smem, size = 0x4, offset = 0x4, fixed_abs, tag = 'smem constant byte address 0x4 - core index']
  #allocation1 [shape = 'u32[144,128]{1,0:T(1,128)}', space=vmem, size = 0x12000, scoped, tag = 'internal scratch']
  #allocation2 [shape = 'f32[8,128]{1,0:T(8,128)}', space=vmem, size = 0x1000, scoped, tag = 'scratch operand']
  #allocation3 [shape = 'f32[8,128]{1,0:T(8,128)}', space=vmem, size = 0x1000, scoped, tag = 'scratch operand']
  #allocation4 [shape = 'f32[8,8,512]{2,1,0:T(8,128)}', space=vmem, size = 0x20000, scoped, tag = 'scratch operand']
  %s0 = inlined_call_operand.hbm [shape: bf16[8,8,16], index: 0, kind: input, shape index: {}]
  %s1 = inlined_call_operand.hbm [shape: bf16[16,512], index: 1, kind: input, shape index: {}]
  %s2 = inlined_call_operand.hbm [shape: bf16[128,512], index: 2, kind: input, shape index: {}]
  %s3 = inlined_call_operand.vmem [shape: f32[1,512], index: 3, kind: input, shape index: {}]
  %s4 = inlined_call_operand.hbm [shape: bf16[128,128], index: 4, kind: input, shape index: {}]
  %s5 = inlined_call_operand.vmem [shape: f32[1,128], index: 5, kind: input, shape index: {}]
  %s6 = inlined_call_operand.hbm [shape: bf16[128,128], index: 6, kind: input, shape index: {}]
  %s7 = inlined_call_operand.vmem [shape: f32[1,128], index: 7, kind: input, shape index: {}]
  %s8 = inlined_call_operand.hbm [shape: f32[8,128], index: 8, kind: output, shape index: {}]
  %s9 = sld [smem:[#allocation0]]
  $region70: #{tpu_custom_call.1} parent=0
    _
  %s11 = ssub.s32 1, %s9
  %s12 = scalar_select 0, %s11, %s9
  $region1: #{tpu_custom_call.1} parent=0
    #allocation5 [shape = 'u8[16384]{0}', space=vmem, size = 0x4000, scoped, tag = 'input window, operand 0, single buffered']
    #allocation6 [shape = 's32[1]{0}', space=sflag, size = 0x4, scoped, tag = 'scoped memory for tpu_custom_call.1']
    #allocation7 [shape = 's32[1]{0}', space=sflag, size = 0x4, scoped, tag = 'scoped memory for tpu_custom_call.1']
    #allocation8 [shape = 'u8[16384]{0}', space=vmem, size = 0x4000, scoped, tag = 'input window, operand 1, single buffered']
    #allocation9 [shape = 's32[1]{0}', space=sflag, size = 0x4, scoped, tag = 'scoped memory for tpu_custom_call.1']
    #allocation10 [shape = 'u8[131072]{0}', space=vmem, size = 0x20000, scoped, tag = 'input window, operand 2, single buffered']
    #allocation11 [shape = 'u8[32768]{0}', space=vmem, size = 0x8000, scoped, tag = 'input window, operand 4, single buffered']
    #allocation12 [shape = 's32[1]{0}', space=sflag, size = 0x4, scoped, tag = 'scoped memory for tpu_custom_call.1']
    #allocation13 [shape = 'u8[32768]{0}', space=vmem, size = 0x8000, scoped, tag = 'input window, operand 6, single buffered']
    #allocation14 [shape = 'u8[4096]{0}', space=vmem, size = 0x1000, scoped, tag = 'output window, operand 0, single buffered']
    %13 = vsyncpa [#allocation6], 0
    %14 = vsyncpa [#allocation9], 0
    %15 = vsyncpa [#allocation12], 0
    %16 = vsyncpa [#allocation7], 0
    // Predicated region
    $region2: #{tpu_custom_call.1} parent=1 // pred_check
      _
    $region3: #{tpu_custom_call.1} parent=1 // pred_check_branch
      %18 = sbr.rel (0) target = $region5
    $region4: #{tpu_custom_call.1} parent=1 // pred_region
      %s20 = ssub.s32 512, 512
      %21 = vsyncadd [#allocation6], %s20
      %s22 = sshll.u32 [#allocation5], 4
      %s23 = int_to_ptr.vmem [resolvable:$true] %s22
      %28 = dma.hbm_to_vmem [thread:$0]  %s0, 512, %s23, [#allocation6], 64, 64, 4
    $region5: #{tpu_custom_call.1} parent=1 // pred_fallthru
      _
    // Predicated region
    $region6: #{tpu_custom_call.1} parent=1 // pred_check
      _
    $region7: #{tpu_custom_call.1} parent=1 // pred_check_branch
      %30 = sbr.rel (0) target = $region9
    $region8: #{tpu_custom_call.1} parent=1 // pred_region
      %s32 = ssub.s32 512, 512
      %33 = vsyncadd [#allocation9], %s32
      %s34 = sshll.u32 [#allocation8], 4
      %s35 = int_to_ptr.vmem [resolvable:$true] %s34
      %40 = dma.hbm_to_vmem [thread:$0]  %s1, 512, %s35, [#allocation9], 256, 256, 16
    $region9: #{tpu_custom_call.1} parent=1 // pred_fallthru
      _
    // Predicated region
    $region10: #{tpu_custom_call.1} parent=1 // pred_check
      _
    $region11: #{tpu_custom_call.1} parent=1 // pred_check_branch
      %42 = sbr.rel (0) target = $region13
    $region12: #{tpu_custom_call.1} parent=1 // pred_region
      %s44 = ssub.s32 4096, 4096
      %45 = vsyncadd [#allocation9], %s44
      %s46 = sshll.u32 [#allocation10], 4
      %s47 = int_to_ptr.vmem [resolvable:$true] %s46
      %52 = dma.hbm_to_vmem [thread:$0]  %s2, 4096, %s47, [#allocation9], 256, 256, 16
    $region13: #{tpu_custom_call.1} parent=1 // pred_fallthru
      _
    // Predicated region
    $region14: #{tpu_custom_call.1} parent=1 // pred_check
      _
    $region15: #{tpu_custom_call.1} parent=1 // pred_check_branch
      %54 = sbr.rel (0) target = $region17
    $region16: #{tpu_custom_call.1} parent=1 // pred_region
      _
    $region17: #{tpu_custom_call.1} parent=1 // pred_fallthru
      _
    // Predicated region
    $region18: #{tpu_custom_call.1} parent=1 // pred_check
      _
    $region19: #{tpu_custom_call.1} parent=1 // pred_check_branch
      %56 = sbr.rel (0) target = $region21
    $region20: #{tpu_custom_call.1} parent=1 // pred_region
      %s58 = ssub.s32 1024, 1024
      %59 = vsyncadd [#allocation12], %s58
      %s60 = sshll.u32 [#allocation11], 4
      %s61 = int_to_ptr.vmem [resolvable:$true] %s60
      %66 = dma.hbm_to_vmem [thread:$0]  %s4, 1024, %s61, [#allocation12], 64, 64, 4
    $region21: #{tpu_custom_call.1} parent=1 // pred_fallthru
      _
    // Predicated region
    $region22: #{tpu_custom_call.1} parent=1 // pred_check
      _
    $region23: #{tpu_custom_call.1} parent=1 // pred_check_branch
      %68 = sbr.rel (0) target = $region25
    $region24: #{tpu_custom_call.1} parent=1 // pred_region
      _
    $region25: #{tpu_custom_call.1} parent=1 // pred_fallthru
      _
    // Predicated region
    $region26: #{tpu_custom_call.1} parent=1 // pred_check
      _
    $region27: #{tpu_custom_call.1} parent=1 // pred_check_branch
      %70 = sbr.rel (0) target = $region29
    $region28: #{tpu_custom_call.1} parent=1 // pred_region
      %s72 = ssub.s32 1024, 1024
      %73 = vsyncadd [#allocation12], %s72
      %s74 = sshll.u32 [#allocation13], 4
      %s75 = int_to_ptr.vmem [resolvable:$true] %s74
      %80 = dma.hbm_to_vmem [thread:$0]  %s6, 1024, %s75, [#allocation12], 64, 64, 4
    $region29: #{tpu_custom_call.1} parent=1 // pred_fallthru
      _
    // Predicated region
    $region30: #{tpu_custom_call.1} parent=1 // pred_check
      _
    $region31: #{tpu_custom_call.1} parent=1 // pred_check_branch
      %82 = sbr.rel (0) target = $region33
    $region32: #{tpu_custom_call.1} parent=1 // pred_region
      _
    $region33: #{tpu_custom_call.1} parent=1 // pred_fallthru
      _
    // Predicated region
    $region34: #{tpu_custom_call.1} parent=1 // pred_check
      _
    $region35: #{tpu_custom_call.1} parent=1 // pred_check_branch
      %84 = sbr.rel (0) target = $region37
    $region36: #{tpu_custom_call.1} parent=1 // pred_region
      %85 = dma.done [#allocation6], 512
    $region37: #{tpu_custom_call.1} parent=1 // pred_fallthru
      _
    // Predicated region
    $region38: #{tpu_custom_call.1} parent=1 // pred_check
      _
    $region39: #{tpu_custom_call.1} parent=1 // pred_check_branch
      %87 = sbr.rel (0) target = $region41
    $region40: #{tpu_custom_call.1} parent=1 // pred_region
      %88 = dma.done [#allocation9], 512
    $region41: #{tpu_custom_call.1} parent=1 // pred_fallthru
      _
    // Predicated region
    $region42: #{tpu_custom_call.1} parent=1 // pred_check
      _
    $region43: #{tpu_custom_call.1} parent=1 // pred_check_branch
      %90 = sbr.rel (0) target = $region45
    $region44: #{tpu_custom_call.1} parent=1 // pred_region
      %91 = dma.done [#allocation9], 4096
    $region45: #{tpu_custom_call.1} parent=1 // pred_fallthru
      _
    // Predicated region
    $region46: #{tpu_custom_call.1} parent=1 // pred_check
      _
    $region47: #{tpu_custom_call.1} parent=1 // pred_check_branch
      %93 = sbr.rel (0) target = $region49
    $region48: #{tpu_custom_call.1} parent=1 // pred_region
      %94 = dma.done [#allocation12], 1024
    $region49: #{tpu_custom_call.1} parent=1 // pred_fallthru
      _
    // Predicated region
    $region50: #{tpu_custom_call.1} parent=1 // pred_check
      _
    $region51: #{tpu_custom_call.1} parent=1 // pred_check_branch
      %96 = sbr.rel (0) target = $region53
    $region52: #{tpu_custom_call.1} parent=1 // pred_region
      %97 = dma.done [#allocation12], 1024
    $region53: #{tpu_custom_call.1} parent=1 // pred_fallthru
      _
    %p99 = scmp.eq.s32.totalorder 0, 0
    // Predicated region
    $region54: #{tpu_custom_call.1} parent=1 // pred_check
      %p100 = pneg %p99
    $region55: #{tpu_custom_call.1} parent=1 // pred_check_branch
      %102 = sbr.rel (%p100) target = $region57
    $region56: #{tpu_custom_call.1} parent=1 // pred_region
      %103 = vst [vmem:[#allocation2] sm:$0xff] 0.0
      %104 = vst [vmem:[#allocation3] sm:$0xff] 0.0
    $region57: #{tpu_custom_call.1} parent=1 // pred_fallthru
      _
    %v105 = vld [vmem:[#allocation5] sm:$0xf]
    %v106 = vld [vmem:[#allocation5 + $0x4] sm:$0xf]
    %v107 = vld [vmem:[#allocation5 + $0x8] sm:$0xf]
    %v108 = vld [vmem:[#allocation5 + $0xc] sm:$0xf]
    %v109 = vld [vmem:[#allocation5 + $0x10] sm:$0xf]
    %v110 = vld [vmem:[#allocation5 + $0x14] sm:$0xf]
    %v111 = vld [vmem:[#allocation5 + $0x18] sm:$0xf]
    %v112 = vld [vmem:[#allocation5 + $0x1c] sm:$0xf]
    %v113 = vld [vmem:[#allocation8] sm:$0xff]
    %v114 = vld [vmem:[#allocation8 + $0x8] sm:$0xff]
    %v115 = vld [vmem:[#allocation8 + $0x10] sm:$0xff]
    %v116 = vld [vmem:[#allocation8 + $0x18] sm:$0xff]
    %v117 = vld [vmem:[%s3] sm:$0xf]
    %v119 = vlaneseq
    %v120 = vshrl.u32 %v119, 7
    %v121 = vsub.s32 0, %v120
    %v122 = vrot.slane %v117, %v121
    %v123 = vlaneseq
    %v124 = vshrl.u32 %v123, 7
    %v125 = vsub.s32 1, %v124
    %v126 = vrot.slane %v117, %v125
    %v127 = vlaneseq
    %v128 = vshrl.u32 %v127, 7
    %v129 = vsub.s32 2, %v128
    %v130 = vrot.slane %v117, %v129
    %v131 = vlaneseq
    %v132 = vshrl.u32 %v131, 7
    %v133 = vsub.s32 3, %v132
    %v134 = vrot.slane %v117, %v133
    %v147 = vunpack.c.l.b16 %v105
    %v148 = vunpack.c.l.b16 %v106
    %v149 = vunpack.c.l.b16 %v107
    %v150 = vunpack.c.l.b16 %v108
    %v151 = vunpack.c.l.b16 %v109
    %v152 = vunpack.c.l.b16 %v110
    %v153 = vunpack.c.l.b16 %v111
    %v154 = vunpack.c.l.b16 %v112
    %v155 = vpack.c.b16 %v148, %v147
    %v156 = vpack.c.b16 %v150, %v149
    %v157 = vpack.c.b16 %v152, %v151
    %v158 = vpack.c.b16 %v154, %v153
    %v163 = vunpack.c.l.b16 %v113
    %v164 = vunpack.c.h.b16 %v113
    %v165 = vunpack.c.l.b16 %v114
    %v166 = vunpack.c.h.b16 %v114
    %v167 = vunpack.c.l.b16 %v115
    %v168 = vunpack.c.h.b16 %v115
    %v169 = vunpack.c.l.b16 %v116
    %v170 = vunpack.c.h.b16 %v116
    %v171 = vpack.c.b16 %v167, %v163
    %v172 = vpack.c.b16 %v168, %v164
    %v173 = vpack.c.b16 %v169, %v165
    %v174 = vpack.c.b16 %v170, %v166
    %vm179 = vcmask 130048
    %v181 = vsel %vm179, %v155, 0
    %v184 = vsel %vm179, %v156, 0
    %v187 = vsel %vm179, %v157, 0
    %v190 = vsel %vm179, %v158, 0
    %192 = vmatprep.subr.bf16.mxu0 0
    %193 = vmatpush1.bf16.msra.mxu0 0
    %194 = vmatprep.subr.bf16.mxu0 0
    %195 = vmatpush1.bf16.msra.mxu0 0
    %196 = vmatprep.subr.bf16.mxu0 0
    %197 = vmatpush1.bf16.msra.mxu0 0
    %198 = vmatprep.subr.bf16.mxu0 0
    %199 = vmatpush1.bf16.msra.mxu0 0
    %200 = vmatprep.subr.bf16.mxu0 0
    %201 = vmatpush1.bf16.msra.mxu0 0
    %202 = vmatprep.subr.bf16.mxu0 0
    %203 = vmatpush1.bf16.msra.mxu0 0
    %204 = vmatprep.subr.bf16.mxu0 0
    %205 = vmatpush1.bf16.msra.mxu0 0
    %206 = vmatprep.subr.bf16.mxu0 %v172
    %207 = vmatpush1.bf16.msra.mxu0 %v171
    %208 = vmatprep.subr.bf16.mxu0 0
    %209 = vmatpush2.bf16.msra.mxu0 0
    %210 = vmatprep.subr.bf16.mxu0 0
    %211 = vmatpush2.bf16.msra.mxu0 0
    %212 = vmatprep.subr.bf16.mxu0 0
    %213 = vmatpush2.bf16.msra.mxu0 0
    %214 = vmatprep.subr.bf16.mxu0 0
    %215 = vmatpush2.bf16.msra.mxu0 0
    %216 = vmatprep.subr.bf16.mxu0 0
    %217 = vmatpush2.bf16.msra.mxu0 0
    %218 = vmatprep.subr.bf16.mxu0 0
    %219 = vmatpush2.bf16.msra.mxu0 0
    %220 = vmatprep.subr.bf16.mxu0 0
    %221 = vmatpush2.bf16.msra.mxu0 0
    %222 = vmatprep.subr.bf16.mxu0 0
    %223 = vmatpush2.bf16.msra.mxu0 0
    %224 = vmatprep.mubr.bf16.mxu0 0
    %225 = vmatmul.mubr.bf16.gmra.mxu0 %v181
    %v226 = vpop.f32.mrf.mxu0
    %v227 = vadd.f32 %v122, %v226
    %v228 = vpop.f32.mrf.mxu0
    %v229 = vadd.f32 %v126, %v228
    %v230 = vpop.f32.mrf.mxu0
    %v231 = vadd.f32 %v122, %v230
    %v232 = vpop.f32.mrf.mxu0
    %v233 = vadd.f32 %v126, %v232
    %234 = vmatprep.mubr.bf16.mxu0 0
    %235 = vmatmul.mubr.bf16.gmra.mxu0 %v184
    %v236 = vpop.f32.mrf.mxu0
    %v237 = vadd.f32 %v122, %v236
    %v238 = vpop.f32.mrf.mxu0
    %v239 = vadd.f32 %v126, %v238
    %v240 = vpop.f32.mrf.mxu0
    %v241 = vadd.f32 %v122, %v240
    %v242 = vpop.f32.mrf.mxu0
    %v243 = vadd.f32 %v126, %v242
    %244 = vmatprep.mubr.bf16.mxu0 0
    %245 = vmatmul.mubr.bf16.gmra.mxu0 %v187
    %v246 = vpop.f32.mrf.mxu0
    %v247 = vadd.f32 %v122, %v246
    %v248 = vpop.f32.mrf.mxu0
    %v249 = vadd.f32 %v126, %v248
    %v250 = vpop.f32.mrf.mxu0
    %v251 = vadd.f32 %v122, %v250
    %v252 = vpop.f32.mrf.mxu0
    %v253 = vadd.f32 %v126, %v252
    %254 = vmatprep.mubr.bf16.mxu0 0
    %255 = vmatmul.mubr.bf16.gmra.mxu0 %v190
    %v256 = vpop.f32.mrf.mxu0
    %v257 = vadd.f32 %v122, %v256
    %v258 = vpop.f32.mrf.mxu0
    %v259 = vadd.f32 %v126, %v258
    %v260 = vpop.f32.mrf.mxu0
    %v261 = vadd.f32 %v122, %v260
    %v262 = vpop.f32.mrf.mxu0
    %v263 = vadd.f32 %v126, %v262
    %264 = vdwg.mxu0
    %265 = vmatprep.subr.bf16.mxu0 0
    %266 = vmatpush1.bf16.msra.mxu0 0
    %267 = vmatprep.subr.bf16.mxu0 0
    %268 = vmatpush1.bf16.msra.mxu0 0
    %269 = vmatprep.subr.bf16.mxu0 0
    %270 = vmatpush1.bf16.msra.mxu0 0
    %271 = vmatprep.subr.bf16.mxu0 0
    %272 = vmatpush1.bf16.msra.mxu0 0
    %273 = vmatprep.subr.bf16.mxu0 0
    %274 = vmatpush1.bf16.msra.mxu0 0
    %275 = vmatprep.subr.bf16.mxu0 0
    %276 = vmatpush1.bf16.msra.mxu0 0
    %277 = vmatprep.subr.bf16.mxu0 0
    %278 = vmatpush1.bf16.msra.mxu0 0
    %279 = vmatprep.subr.bf16.mxu0 %v174
    %280 = vmatpush1.bf16.msra.mxu0 %v173
    %281 = vmatprep.subr.bf16.mxu0 0
    %282 = vmatpush2.bf16.msra.mxu0 0
    %283 = vmatprep.subr.bf16.mxu0 0
    %284 = vmatpush2.bf16.msra.mxu0 0
    %285 = vmatprep.subr.bf16.mxu0 0
    %286 = vmatpush2.bf16.msra.mxu0 0
    %287 = vmatprep.subr.bf16.mxu0 0
    %288 = vmatpush2.bf16.msra.mxu0 0
    %289 = vmatprep.subr.bf16.mxu0 0
    %290 = vmatpush2.bf16.msra.mxu0 0
    %291 = vmatprep.subr.bf16.mxu0 0
    %292 = vmatpush2.bf16.msra.mxu0 0
    %293 = vmatprep.subr.bf16.mxu0 0
    %294 = vmatpush2.bf16.msra.mxu0 0
    %295 = vmatprep.subr.bf16.mxu0 0
    %296 = vmatpush2.bf16.msra.mxu0 0
    %297 = vmatprep.mubr.bf16.mxu0 0
    %298 = vmatmul.mubr.bf16.gmra.mxu0 %v181
    %v299 = vpop.f32.mrf.mxu0
    %v300 = vadd.f32 %v130, %v299
    %v301 = vpop.f32.mrf.mxu0
    %v302 = vadd.f32 %v134, %v301
    %v303 = vpop.f32.mrf.mxu0
    %v304 = vadd.f32 %v130, %v303
    %v305 = vpop.f32.mrf.mxu0
    %v306 = vadd.f32 %v134, %v305
    %307 = vmatprep.mubr.bf16.mxu0 0
    %308 = vmatmul.mubr.bf16.gmra.mxu0 %v184
    %v309 = vpop.f32.mrf.mxu0
    %v310 = vadd.f32 %v130, %v309
    %v311 = vpop.f32.mrf.mxu0
    %v312 = vadd.f32 %v134, %v311
    %v313 = vpop.f32.mrf.mxu0
    %v314 = vadd.f32 %v130, %v313
    %v315 = vpop.f32.mrf.mxu0
    %v316 = vadd.f32 %v134, %v315
    %317 = vmatprep.mubr.bf16.mxu0 0
    %318 = vmatmul.mubr.bf16.gmra.mxu0 %v187
    %v319 = vpop.f32.mrf.mxu0
    %v320 = vadd.f32 %v130, %v319
    %v321 = vpop.f32.mrf.mxu0
    %v322 = vadd.f32 %v134, %v321
    %v323 = vpop.f32.mrf.mxu0
    %v324 = vadd.f32 %v130, %v323
    %v325 = vpop.f32.mrf.mxu0
    %v326 = vadd.f32 %v134, %v325
    %327 = vmatprep.mubr.bf16.mxu0 0
    %328 = vmatmul.mubr.bf16.gmra.mxu0 %v190
    %v329 = vpop.f32.mrf.mxu0
    %v330 = vadd.f32 %v130, %v329
    %v331 = vpop.f32.mrf.mxu0
    %v332 = vadd.f32 %v134, %v331
    %v333 = vpop.f32.mrf.mxu0
    %v334 = vadd.f32 %v130, %v333
    %v335 = vpop.f32.mrf.mxu0
    %v336 = vadd.f32 %v134, %v335
    %337 = vdwg.mxu0
    %338 = vst [vmem:[#allocation4] sm:$0xff] %v227
    %339 = vst [vmem:[#allocation4 + $0x8] sm:$0xff] %v229
    %340 = vst [vmem:[#allocation4 + $0x10] sm:$0xff] %v300
    %341 = vst [vmem:[#allocation4 + $0x18] sm:$0xff] %v302
    %342 = vst [vmem:[#allocation4 + $0x20] sm:$0xff] %v231
    %343 = vst [vmem:[#allocation4 + $0x28] sm:$0xff] %v233
    %344 = vst [vmem:[#allocation4 + $0x30] sm:$0xff] %v304
    %345 = vst [vmem:[#allocation4 + $0x38] sm:$0xff] %v306
    %346 = vst [vmem:[#allocation4 + $0x40] sm:$0xff] %v237
    %347 = vst [vmem:[#allocation4 + $0x48] sm:$0xff] %v239
    %348 = vst [vmem:[#allocation4 + $0x50] sm:$0xff] %v310
    %349 = vst [vmem:[#allocation4 + $0x58] sm:$0xff] %v312
    %350 = vst [vmem:[#allocation4 + $0x60] sm:$0xff] %v241
    %351 = vst [vmem:[#allocation4 + $0x68] sm:$0xff] %v243
    %352 = vst [vmem:[#allocation4 + $0x70] sm:$0xff] %v314
    %353 = vst [vmem:[#allocation4 + $0x78] sm:$0xff] %v316
    %354 = vst [vmem:[#allocation4 + $0x80] sm:$0xff] %v247
    %355 = vst [vmem:[#allocation4 + $0x88] sm:$0xff] %v249
    %356 = vst [vmem:[#allocation4 + $0x90] sm:$0xff] %v320
    %357 = vst [vmem:[#allocation4 + $0x98] sm:$0xff] %v322
    %358 = vst [vmem:[#allocation4 + $0xa0] sm:$0xff] %v251
    %359 = vst [vmem:[#allocation4 + $0xa8] sm:$0xff] %v253
    %360 = vst [vmem:[#allocation4 + $0xb0] sm:$0xff] %v324
    %361 = vst [vmem:[#allocation4 + $0xb8] sm:$0xff] %v326
    %362 = vst [vmem:[#allocation4 + $0xc0] sm:$0xff] %v257
    %363 = vst [vmem:[#allocation4 + $0xc8] sm:$0xff] %v259
    %364 = vst [vmem:[#allocation4 + $0xd0] sm:$0xff] %v330
    %365 = vst [vmem:[#allocation4 + $0xd8] sm:$0xff] %v332
    %366 = vst [vmem:[#allocation4 + $0xe0] sm:$0xff] %v261
    %367 = vst [vmem:[#allocation4 + $0xe8] sm:$0xff] %v263
    %368 = vst [vmem:[#allocation4 + $0xf0] sm:$0xff] %v334
    %369 = vst [vmem:[#allocation4 + $0xf8] sm:$0xff] %v336
    %v370 = vld [vmem:[#allocation10] sm:$0xff]
    %v371 = vld [vmem:[#allocation10 + $0x8] sm:$0xff]
    %v372 = vld [vmem:[#allocation10 + $0x10] sm:$0xff]
    %v373 = vld [vmem:[#allocation10 + $0x18] sm:$0xff]
    %v374 = vld [vmem:[#allocation10 + $0x20] sm:$0xff]
    %v375 = vld [vmem:[#allocation10 + $0x28] sm:$0xff]
    %v376 = vld [vmem:[#allocation10 + $0x30] sm:$0xff]
    %v377 = vld [vmem:[#allocation10 + $0x38] sm:$0xff]
    %v378 = vld [vmem:[#allocation10 + $0x40] sm:$0xff]
    %v379 = vld [vmem:[#allocation10 + $0x48] sm:$0xff]
    %v380 = vld [vmem:[#allocation10 + $0x50] sm:$0xff]
    %v381 = vld [vmem:[#allocation10 + $0x58] sm:$0xff]
    %v382 = vld [vmem:[#allocation10 + $0x60] sm:$0xff]
    %v383 = vld [vmem:[#allocation10 + $0x68] sm:$0xff]
    %v384 = vld [vmem:[#allocation10 + $0x70] sm:$0xff]
    %v385 = vld [vmem:[#allocation10 + $0x78] sm:$0xff]
    %v386 = vld [vmem:[#allocation10 + $0x80] sm:$0xff]
    %v387 = vld [vmem:[#allocation10 + $0x88] sm:$0xff]
    %v388 = vld [vmem:[#allocation10 + $0x90] sm:$0xff]
    %v389 = vld [vmem:[#allocation10 + $0x98] sm:$0xff]
    %v390 = vld [vmem:[#allocation10 + $0xa0] sm:$0xff]
    %v391 = vld [vmem:[#allocation10 + $0xa8] sm:$0xff]
    %v392 = vld [vmem:[#allocation10 + $0xb0] sm:$0xff]
    %v393 = vld [vmem:[#allocation10 + $0xb8] sm:$0xff]
    %v394 = vld [vmem:[#allocation10 + $0xc0] sm:$0xff]
    %v395 = vld [vmem:[#allocation10 + $0xc8] sm:$0xff]
    %v396 = vld [vmem:[#allocation10 + $0xd0] sm:$0xff]
    %v397 = vld [vmem:[#allocation10 + $0xd8] sm:$0xff]
    %v398 = vld [vmem:[#allocation10 + $0xe0] sm:$0xff]
    %v399 = vld [vmem:[#allocation10 + $0xe8] sm:$0xff]
    %v400 = vld [vmem:[#allocation10 + $0xf0] sm:$0xff]
    %v401 = vld [vmem:[#allocation10 + $0xf8] sm:$0xff]
    %v402 = vld [vmem:[#allocation2] sm:$0xff]
    %v403 = vld [vmem:[#allocation3] sm:$0xff]
    %v404 = vld [vmem:[#allocation4] sm:$0xff]
    %v405 = vld [vmem:[#allocation4 + $0x8] sm:$0xff]
    %v406 = vld [vmem:[#allocation4 + $0x10] sm:$0xff]
    %v407 = vld [vmem:[#allocation4 + $0x18] sm:$0xff]
    %v408 = vpack.c.bf16 %v402, %v402
    %v441 = vunpack.c.l.b16 %v370
    %v442 = vunpack.c.h.b16 %v370
    %v443 = vunpack.c.l.b16 %v371
    %v444 = vunpack.c.h.b16 %v371
    %v445 = vunpack.c.l.b16 %v372
    %v446 = vunpack.c.h.b16 %v372
    %v447 = vunpack.c.l.b16 %v373
    %v448 = vunpack.c.h.b16 %v373
    %v449 = vunpack.c.l.b16 %v374
    %v450 = vunpack.c.h.b16 %v374
    %v451 = vunpack.c.l.b16 %v375
    %v452 = vunpack.c.h.b16 %v375
    %v453 = vunpack.c.l.b16 %v376
    %v454 = vunpack.c.h.b16 %v376
    %v455 = vunpack.c.l.b16 %v377
    %v456 = vunpack.c.h.b16 %v377
    %v457 = vunpack.c.l.b16 %v378
    %v458 = vunpack.c.h.b16 %v378
    %v459 = vunpack.c.l.b16 %v379
    %v460 = vunpack.c.h.b16 %v379
    %v461 = vunpack.c.l.b16 %v380
    %v462 = vunpack.c.h.b16 %v380
    %v463 = vunpack.c.l.b16 %v381
    %v464 = vunpack.c.h.b16 %v381
    %v465 = vunpack.c.l.b16 %v382
    %v466 = vunpack.c.h.b16 %v382
    %v467 = vunpack.c.l.b16 %v383
    %v468 = vunpack.c.h.b16 %v383
    %v469 = vunpack.c.l.b16 %v384
    %v470 = vunpack.c.h.b16 %v384
    %v471 = vunpack.c.l.b16 %v385
    %v472 = vunpack.c.h.b16 %v385
    %v473 = vunpack.c.l.b16 %v386
    %v474 = vunpack.c.h.b16 %v386
    %v475 = vunpack.c.l.b16 %v387
    %v476 = vunpack.c.h.b16 %v387
    %v477 = vunpack.c.l.b16 %v388
    %v478 = vunpack.c.h.b16 %v388
    %v479 = vunpack.c.l.b16 %v389
    %v480 = vunpack.c.h.b16 %v389
    %v481 = vunpack.c.l.b16 %v390
    %v482 = vunpack.c.h.b16 %v390
    %v483 = vunpack.c.l.b16 %v391
    %v484 = vunpack.c.h.b16 %v391
    %v485 = vunpack.c.l.b16 %v392
    %v486 = vunpack.c.h.b16 %v392
    %v487 = vunpack.c.l.b16 %v393
    %v488 = vunpack.c.h.b16 %v393
    %v489 = vunpack.c.l.b16 %v394
    %v490 = vunpack.c.h.b16 %v394
    %v491 = vunpack.c.l.b16 %v395
    %v492 = vunpack.c.h.b16 %v395
    %v493 = vunpack.c.l.b16 %v396
    %v494 = vunpack.c.h.b16 %v396
    %v495 = vunpack.c.l.b16 %v397
    %v496 = vunpack.c.h.b16 %v397
    %v497 = vunpack.c.l.b16 %v398
    %v498 = vunpack.c.h.b16 %v398
    %v499 = vunpack.c.l.b16 %v399
    %v500 = vunpack.c.h.b16 %v399
    %v501 = vunpack.c.l.b16 %v400
    %v502 = vunpack.c.h.b16 %v400
    %v503 = vunpack.c.l.b16 %v401
    %v504 = vunpack.c.h.b16 %v401
    %v505 = vpack.c.b16 %v445, %v441
    %v506 = vpack.c.b16 %v446, %v442
    %v507 = vpack.c.b16 %v447, %v443
    %v508 = vpack.c.b16 %v448, %v444
    %v509 = vpack.c.b16 %v453, %v449
    %v510 = vpack.c.b16 %v454, %v450
    %v511 = vpack.c.b16 %v455, %v451
    %v512 = vpack.c.b16 %v456, %v452
    %v513 = vpack.c.b16 %v461, %v457
    %v514 = vpack.c.b16 %v462, %v458
    %v515 = vpack.c.b16 %v463, %v459
    %v516 = vpack.c.b16 %v464, %v460
    %v517 = vpack.c.b16 %v469, %v465
    %v518 = vpack.c.b16 %v470, %v466
    %v519 = vpack.c.b16 %v471, %v467
    %v520 = vpack.c.b16 %v472, %v468
    %v521 = vpack.c.b16 %v477, %v473
    %v522 = vpack.c.b16 %v478, %v474
    %v523 = vpack.c.b16 %v479, %v475
    %v524 = vpack.c.b16 %v480, %v476
    %v525 = vpack.c.b16 %v485, %v481
    %v526 = vpack.c.b16 %v486, %v482
    %v527 = vpack.c.b16 %v487, %v483
    %v528 = vpack.c.b16 %v488, %v484
    %v529 = vpack.c.b16 %v493, %v489
    %v530 = vpack.c.b16 %v494, %v490
    %v531 = vpack.c.b16 %v495, %v491
    %v532 = vpack.c.b16 %v496, %v492
    %v533 = vpack.c.b16 %v501, %v497
    %v534 = vpack.c.b16 %v502, %v498
    %v535 = vpack.c.b16 %v503, %v499
    %v536 = vpack.c.b16 %v504, %v500
    %569 = vmatprep.subr.bf16.mxu0 %v534
    %570 = vmatpush1.bf16.msra.mxu0 %v533
    %571 = vmatprep.subr.bf16.mxu0 %v530
    %572 = vmatpush1.bf16.msra.mxu0 %v529
    %573 = vmatprep.subr.bf16.mxu0 %v526
    %574 = vmatpush1.bf16.msra.mxu0 %v525
    %575 = vmatprep.subr.bf16.mxu0 %v522
    %576 = vmatpush1.bf16.msra.mxu0 %v521
    %577 = vmatprep.subr.bf16.mxu0 %v518
    %578 = vmatpush1.bf16.msra.mxu0 %v517
    %579 = vmatprep.subr.bf16.mxu0 %v514
    %580 = vmatpush1.bf16.msra.mxu0 %v513
    %581 = vmatprep.subr.bf16.mxu0 %v510
    %582 = vmatpush1.bf16.msra.mxu0 %v509
    %583 = vmatprep.subr.bf16.mxu0 %v506
    %584 = vmatpush1.bf16.msra.mxu0 %v505
    %585 = vmatprep.subr.bf16.mxu0 0
    %586 = vmatpush2.bf16.msra.mxu0 0
    %587 = vmatprep.subr.bf16.mxu0 0
    %588 = vmatpush2.bf16.msra.mxu0 0
    %589 = vmatprep.subr.bf16.mxu0 0
    %590 = vmatpush2.bf16.msra.mxu0 0
    %591 = vmatprep.subr.bf16.mxu0 0
    %592 = vmatpush2.bf16.msra.mxu0 0
    %593 = vmatprep.subr.bf16.mxu0 0
    %594 = vmatpush2.bf16.msra.mxu0 0
    %595 = vmatprep.subr.bf16.mxu0 0
    %596 = vmatpush2.bf16.msra.mxu0 0
    %597 = vmatprep.subr.bf16.mxu0 0
    %598 = vmatpush2.bf16.msra.mxu0 0
    %599 = vmatprep.subr.bf16.mxu0 0
    %600 = vmatpush2.bf16.msra.mxu0 0
    %601 = vmatprep.mubr.bf16.mxu0 0
    %602 = vmatmul.mubr.bf16.gmra.mxu0 %v408
    %v603 = vpop.f32.mrf.mxu0
    %v604 = vadd.f32 0.0, %v603
    %v605 = vpop.f32.mrf.mxu0
    %v606 = vadd.f32 0.0, %v605
    %v607 = vpop.f32.mrf.mxu0
    %v608 = vpop.f32.mrf.mxu0
    %609 = vdwg.mxu0
    %610 = vmatprep.subr.bf16.mxu0 %v536
    %611 = vmatpush1.bf16.msra.mxu0 %v535
    %612 = vmatprep.subr.bf16.mxu0 %v532
    %613 = vmatpush1.bf16.msra.mxu0 %v531
    %614 = vmatprep.subr.bf16.mxu0 %v528
    %615 = vmatpush1.bf16.msra.mxu0 %v527
    %616 = vmatprep.subr.bf16.mxu0 %v524
    %617 = vmatpush1.bf16.msra.mxu0 %v523
    %618 = vmatprep.subr.bf16.mxu0 %v520
    %619 = vmatpush1.bf16.msra.mxu0 %v519
    %620 = vmatprep.subr.bf16.mxu0 %v516
    %621 = vmatpush1.bf16.msra.mxu0 %v515
    %622 = vmatprep.subr.bf16.mxu0 %v512
    %623 = vmatpush1.bf16.msra.mxu0 %v511
    %624 = vmatprep.subr.bf16.mxu0 %v508
    %625 = vmatpush1.bf16.msra.mxu0 %v507
    %626 = vmatprep.subr.bf16.mxu0 0
    %627 = vmatpush2.bf16.msra.mxu0 0
    %628 = vmatprep.subr.bf16.mxu0 0
    %629 = vmatpush2.bf16.msra.mxu0 0
    %630 = vmatprep.subr.bf16.mxu0 0
    %631 = vmatpush2.bf16.msra.mxu0 0
    %632 = vmatprep.subr.bf16.mxu0 0
    %633 = vmatpush2.bf16.msra.mxu0 0
    %634 = vmatprep.subr.bf16.mxu0 0
    %635 = vmatpush2.bf16.msra.mxu0 0
    %636 = vmatprep.subr.bf16.mxu0 0
    %637 = vmatpush2.bf16.msra.mxu0 0
    %638 = vmatprep.subr.bf16.mxu0 0
    %639 = vmatpush2.bf16.msra.mxu0 0
    %640 = vmatprep.subr.bf16.mxu0 0
    %641 = vmatpush2.bf16.msra.mxu0 0
    %642 = vmatprep.mubr.bf16.mxu0 0
    %643 = vmatmul.mubr.bf16.gmra.mxu0 %v408
    %v644 = vpop.f32.mrf.mxu0
    %v645 = vadd.f32 0.0, %v644
    %v646 = vpop.f32.mrf.mxu0
    %v647 = vadd.f32 0.0, %v646
    %v648 = vpop.f32.mrf.mxu0
    %v649 = vpop.f32.mrf.mxu0
    %650 = vdwg.mxu0
    %v651 = vadd.f32 %v404, %v604
    %v652 = vadd.f32 %v405, %v606
    %v653 = vadd.f32 %v406, %v645
    %v654 = vadd.f32 %v407, %v647
    %v655 = vxor.u32 %v651, 2147483648
    %v656 = vxor.u32 %v652, 2147483648
    %v657 = vxor.u32 %v653, 2147483648
    %v658 = vmul.f32 %v655, 1.442695
    %v659 = vpow.pop %v658
    %v660 = vmul.f32 %v656, 1.442695
    %v661 = vpow.pop %v660
    %v662 = vmul.f32 %v657, 1.442695
    %v663 = vpow.pop %v662
    %v664 = vadd.f32 %v659, 1.0
    %v665 = vadd.f32 %v661, 1.0
    %v666 = vadd.f32 %v663, 1.0
    %v667 = vrcp.pop %v664
    %v668 = vmul.f32 1.0, %v667
    %v669 = vrcp.pop %v665
    %v670 = vmul.f32 1.0, %v669
    %v671 = vrcp.pop %v666
    %v672 = vmul.f32 1.0, %v671
    %v673 = vtanh.pop %v654
    %v674 = vmul.f32 %v670, %v403
    %v675 = vmul.f32 %v668, %v673
    %v676 = vadd.f32 %v674, %v675
    %v677 = vtanh.pop %v676
    %v678 = vmul.f32 %v672, %v677
    %s679 = scalar_lea.vmem [#allocation4], 32
    %v680 = vld [vmem:[%s679] sm:$0xff]
    %v681 = vld [vmem:[%s679 + $0x8] sm:$0xff]
    %v682 = vld [vmem:[%s679 + $0x10] sm:$0xff]
    %v683 = vld [vmem:[%s679 + $0x18] sm:$0xff]
    %v684 = vpack.c.bf16 %v678, %v678
    %685 = vmatprep.subr.bf16.mxu0 %v534
    %686 = vmatpush1.bf16.msra.mxu0 %v533
    %687 = vmatprep.subr.bf16.mxu0 %v530
    %688 = vmatpush1.bf16.msra.mxu0 %v529
    %689 = vmatprep.subr.bf16.mxu0 %v526
    %690 = vmatpush1.bf16.msra.mxu0 %v525
    %691 = vmatprep.subr.bf16.mxu0 %v522
    %692 = vmatpush1.bf16.msra.mxu0 %v521
    %693 = vmatprep.subr.bf16.mxu0 %v518
    %694 = vmatpush1.bf16.msra.mxu0 %v517
    %695 = vmatprep.subr.bf16.mxu0 %v514
    %696 = vmatpush1.bf16.msra.mxu0 %v513
    %697 = vmatprep.subr.bf16.mxu0 %v510
    %698 = vmatpush1.bf16.msra.mxu0 %v509
    %699 = vmatprep.subr.bf16.mxu0 %v506
    %700 = vmatpush1.bf16.msra.mxu0 %v505
    %701 = vmatprep.subr.bf16.mxu0 0
    %702 = vmatpush2.bf16.msra.mxu0 0
    %703 = vmatprep.subr.bf16.mxu0 0
    %704 = vmatpush2.bf16.msra.mxu0 0
    %705 = vmatprep.subr.bf16.mxu0 0
    %706 = vmatpush2.bf16.msra.mxu0 0
    %707 = vmatprep.subr.bf16.mxu0 0
    %708 = vmatpush2.bf16.msra.mxu0 0
    %709 = vmatprep.subr.bf16.mxu0 0
    %710 = vmatpush2.bf16.msra.mxu0 0
    %711 = vmatprep.subr.bf16.mxu0 0
    %712 = vmatpush2.bf16.msra.mxu0 0
    %713 = vmatprep.subr.bf16.mxu0 0
    %714 = vmatpush2.bf16.msra.mxu0 0
    %715 = vmatprep.subr.bf16.mxu0 0
    %716 = vmatpush2.bf16.msra.mxu0 0
    %717 = vmatprep.mubr.bf16.mxu0 0
    %718 = vmatmul.mubr.bf16.gmra.mxu0 %v684
    %v719 = vpop.f32.mrf.mxu0
    %v720 = vadd.f32 0.0, %v719
    %v721 = vpop.f32.mrf.mxu0
    %v722 = vadd.f32 0.0, %v721
    %v723 = vpop.f32.mrf.mxu0
    %v724 = vpop.f32.mrf.mxu0
    %725 = vdwg.mxu0
    %726 = vmatprep.subr.bf16.mxu0 %v536
    %727 = vmatpush1.bf16.msra.mxu0 %v535
    %728 = vmatprep.subr.bf16.mxu0 %v532
    %729 = vmatpush1.bf16.msra.mxu0 %v531
    %730 = vmatprep.subr.bf16.mxu0 %v528
    %731 = vmatpush1.bf16.msra.mxu0 %v527
    %732 = vmatprep.subr.bf16.mxu0 %v524
    %733 = vmatpush1.bf16.msra.mxu0 %v523
    %734 = vmatprep.subr.bf16.mxu0 %v520
    %735 = vmatpush1.bf16.msra.mxu0 %v519
    %736 = vmatprep.subr.bf16.mxu0 %v516
    %737 = vmatpush1.bf16.msra.mxu0 %v515
    %738 = vmatprep.subr.bf16.mxu0 %v512
    %739 = vmatpush1.bf16.msra.mxu0 %v511
    %740 = vmatprep.subr.bf16.mxu0 %v508
    %741 = vmatpush1.bf16.msra.mxu0 %v507
    %742 = vmatprep.subr.bf16.mxu0 0
    %743 = vmatpush2.bf16.msra.mxu0 0
    %744 = vmatprep.subr.bf16.mxu0 0
    %745 = vmatpush2.bf16.msra.mxu0 0
    %746 = vmatprep.subr.bf16.mxu0 0
    %747 = vmatpush2.bf16.msra.mxu0 0
    %748 = vmatprep.subr.bf16.mxu0 0
    %749 = vmatpush2.bf16.msra.mxu0 0
    %750 = vmatprep.subr.bf16.mxu0 0
    %751 = vmatpush2.bf16.msra.mxu0 0
    %752 = vmatprep.subr.bf16.mxu0 0
    %753 = vmatpush2.bf16.msra.mxu0 0
    %754 = vmatprep.subr.bf16.mxu0 0
    %755 = vmatpush2.bf16.msra.mxu0 0
    %756 = vmatprep.subr.bf16.mxu0 0
    %757 = vmatpush2.bf16.msra.mxu0 0
    %758 = vmatprep.mubr.bf16.mxu0 0
    %759 = vmatmul.mubr.bf16.gmra.mxu0 %v684
    %v760 = vpop.f32.mrf.mxu0
    %v761 = vadd.f32 0.0, %v760
    %v762 = vpop.f32.mrf.mxu0
    %v763 = vadd.f32 0.0, %v762
    %v764 = vpop.f32.mrf.mxu0
    %v765 = vpop.f32.mrf.mxu0
    %766 = vdwg.mxu0
    %v767 = vadd.f32 %v680, %v720
    %v768 = vadd.f32 %v681, %v722
    %v769 = vadd.f32 %v682, %v761
    %v770 = vadd.f32 %v683, %v763
    %v771 = vxor.u32 %v767, 2147483648
    %v772 = vxor.u32 %v768, 2147483648
    %v773 = vxor.u32 %v769, 2147483648
    %v774 = vmul.f32 %v771, 1.442695
    %v775 = vpow.pop %v774
    %v776 = vmul.f32 %v772, 1.442695
    %v777 = vpow.pop %v776
    %v778 = vmul.f32 %v773, 1.442695
    %v779 = vpow.pop %v778
    %v780 = vadd.f32 %v775, 1.0
    %v781 = vadd.f32 %v777, 1.0
    %v782 = vadd.f32 %v779, 1.0
    %v783 = vrcp.pop %v780
    %v784 = vmul.f32 1.0, %v783
    %v785 = vrcp.pop %v781
    %v786 = vmul.f32 1.0, %v785
    %v787 = vrcp.pop %v782
    %v788 = vmul.f32 1.0, %v787
    %v789 = vtanh.pop %v770
    %v790 = vmul.f32 %v786, %v676
    %v791 = vmul.f32 %v784, %v789
    %v792 = vadd.f32 %v790, %v791
    %v793 = vtanh.pop %v792
    %v794 = vmul.f32 %v788, %v793
    %s795 = scalar_lea.vmem [#allocation4], 64
    %v796 = vld [vmem:[%s795] sm:$0xff]
    %v797 = vld [vmem:[%s795 + $0x8] sm:$0xff]
    %v798 = vld [vmem:[%s795 + $0x10] sm:$0xff]
    %v799 = vld [vmem:[%s795 + $0x18] sm:$0xff]
    %v800 = vpack.c.bf16 %v794, %v794
    %801 = vmatprep.subr.bf16.mxu0 %v534
    %802 = vmatpush1.bf16.msra.mxu0 %v533
    %803 = vmatprep.subr.bf16.mxu0 %v530
    %804 = vmatpush1.bf16.msra.mxu0 %v529
    %805 = vmatprep.subr.bf16.mxu0 %v526
    %806 = vmatpush1.bf16.msra.mxu0 %v525
    %807 = vmatprep.subr.bf16.mxu0 %v522
    %808 = vmatpush1.bf16.msra.mxu0 %v521
    %809 = vmatprep.subr.bf16.mxu0 %v518
    %810 = vmatpush1.bf16.msra.mxu0 %v517
    %811 = vmatprep.subr.bf16.mxu0 %v514
    %812 = vmatpush1.bf16.msra.mxu0 %v513
    %813 = vmatprep.subr.bf16.mxu0 %v510
    %814 = vmatpush1.bf16.msra.mxu0 %v509
    %815 = vmatprep.subr.bf16.mxu0 %v506
    %816 = vmatpush1.bf16.msra.mxu0 %v505
    %817 = vmatprep.subr.bf16.mxu0 0
    %818 = vmatpush2.bf16.msra.mxu0 0
    %819 = vmatprep.subr.bf16.mxu0 0
    %820 = vmatpush2.bf16.msra.mxu0 0
    %821 = vmatprep.subr.bf16.mxu0 0
    %822 = vmatpush2.bf16.msra.mxu0 0
    %823 = vmatprep.subr.bf16.mxu0 0
    %824 = vmatpush2.bf16.msra.mxu0 0
    %825 = vmatprep.subr.bf16.mxu0 0
    %826 = vmatpush2.bf16.msra.mxu0 0
    %827 = vmatprep.subr.bf16.mxu0 0
    %828 = vmatpush2.bf16.msra.mxu0 0
    %829 = vmatprep.subr.bf16.mxu0 0
    %830 = vmatpush2.bf16.msra.mxu0 0
    %831 = vmatprep.subr.bf16.mxu0 0
    %832 = vmatpush2.bf16.msra.mxu0 0
    %833 = vmatprep.mubr.bf16.mxu0 0
    %834 = vmatmul.mubr.bf16.gmra.mxu0 %v800
    %v835 = vpop.f32.mrf.mxu0
    %v836 = vadd.f32 0.0, %v835
    %v837 = vpop.f32.mrf.mxu0
    %v838 = vadd.f32 0.0, %v837
    %v839 = vpop.f32.mrf.mxu0
    %v840 = vpop.f32.mrf.mxu0
    %841 = vdwg.mxu0
    %842 = vmatprep.subr.bf16.mxu0 %v536
    %843 = vmatpush1.bf16.msra.mxu0 %v535
    %844 = vmatprep.subr.bf16.mxu0 %v532
    %845 = vmatpush1.bf16.msra.mxu0 %v531
    %846 = vmatprep.subr.bf16.mxu0 %v528
    %847 = vmatpush1.bf16.msra.mxu0 %v527
    %848 = vmatprep.subr.bf16.mxu0 %v524
    %849 = vmatpush1.bf16.msra.mxu0 %v523
    %850 = vmatprep.subr.bf16.mxu0 %v520
    %851 = vmatpush1.bf16.msra.mxu0 %v519
    %852 = vmatprep.subr.bf16.mxu0 %v516
    %853 = vmatpush1.bf16.msra.mxu0 %v515
    %854 = vmatprep.subr.bf16.mxu0 %v512
    %855 = vmatpush1.bf16.msra.mxu0 %v511
    %856 = vmatprep.subr.bf16.mxu0 %v508
    %857 = vmatpush1.bf16.msra.mxu0 %v507
    %858 = vmatprep.subr.bf16.mxu0 0
    %859 = vmatpush2.bf16.msra.mxu0 0
    %860 = vmatprep.subr.bf16.mxu0 0
    %861 = vmatpush2.bf16.msra.mxu0 0
    %862 = vmatprep.subr.bf16.mxu0 0
    %863 = vmatpush2.bf16.msra.mxu0 0
    %864 = vmatprep.subr.bf16.mxu0 0
    %865 = vmatpush2.bf16.msra.mxu0 0
    %866 = vmatprep.subr.bf16.mxu0 0
    %867 = vmatpush2.bf16.msra.mxu0 0
    %868 = vmatprep.subr.bf16.mxu0 0
    %869 = vmatpush2.bf16.msra.mxu0 0
    %870 = vmatprep.subr.bf16.mxu0 0
    %871 = vmatpush2.bf16.msra.mxu0 0
    %872 = vmatprep.subr.bf16.mxu0 0
    %873 = vmatpush2.bf16.msra.mxu0 0
    %874 = vmatprep.mubr.bf16.mxu0 0
    %875 = vmatmul.mubr.bf16.gmra.mxu0 %v800
    %v876 = vpop.f32.mrf.mxu0
    %v877 = vadd.f32 0.0, %v876
    %v878 = vpop.f32.mrf.mxu0
    %v879 = vadd.f32 0.0, %v878
    %v880 = vpop.f32.mrf.mxu0
    %v881 = vpop.f32.mrf.mxu0
    %882 = vdwg.mxu0
    %v883 = vadd.f32 %v796, %v836
    %v884 = vadd.f32 %v797, %v838
    %v885 = vadd.f32 %v798, %v877
    %v886 = vadd.f32 %v799, %v879
    %v887 = vxor.u32 %v883, 2147483648
    %v888 = vxor.u32 %v884, 2147483648
    %v889 = vxor.u32 %v885, 2147483648
    %v890 = vmul.f32 %v887, 1.442695
    %v891 = vpow.pop %v890
    %v892 = vmul.f32 %v888, 1.442695
    %v893 = vpow.pop %v892
    %v894 = vmul.f32 %v889, 1.442695
    %v895 = vpow.pop %v894
    %v896 = vadd.f32 %v891, 1.0
    %v897 = vadd.f32 %v893, 1.0
    %v898 = vadd.f32 %v895, 1.0
    %v899 = vrcp.pop %v896
    %v900 = vmul.f32 1.0, %v899
    %v901 = vrcp.pop %v897
    %v902 = vmul.f32 1.0, %v901
    %v903 = vrcp.pop %v898
    %v904 = vmul.f32 1.0, %v903
    %v905 = vtanh.pop %v886
    %v906 = vmul.f32 %v902, %v792
    %v907 = vmul.f32 %v900, %v905
    %v908 = vadd.f32 %v906, %v907
    %v909 = vtanh.pop %v908
    %v910 = vmul.f32 %v904, %v909
    %s911 = scalar_lea.vmem [#allocation4], 96
    %v912 = vld [vmem:[%s911] sm:$0xff]
    %v913 = vld [vmem:[%s911 + $0x8] sm:$0xff]
    %v914 = vld [vmem:[%s911 + $0x10] sm:$0xff]
    %v915 = vld [vmem:[%s911 + $0x18] sm:$0xff]
    %v916 = vpack.c.bf16 %v910, %v910
    %917 = vmatprep.subr.bf16.mxu0 %v534
    %918 = vmatpush1.bf16.msra.mxu0 %v533
    %919 = vmatprep.subr.bf16.mxu0 %v530
    %920 = vmatpush1.bf16.msra.mxu0 %v529
    %921 = vmatprep.subr.bf16.mxu0 %v526
    %922 = vmatpush1.bf16.msra.mxu0 %v525
    %923 = vmatprep.subr.bf16.mxu0 %v522
    %924 = vmatpush1.bf16.msra.mxu0 %v521
    %925 = vmatprep.subr.bf16.mxu0 %v518
    %926 = vmatpush1.bf16.msra.mxu0 %v517
    %927 = vmatprep.subr.bf16.mxu0 %v514
    %928 = vmatpush1.bf16.msra.mxu0 %v513
    %929 = vmatprep.subr.bf16.mxu0 %v510
    %930 = vmatpush1.bf16.msra.mxu0 %v509
    %931 = vmatprep.subr.bf16.mxu0 %v506
    %932 = vmatpush1.bf16.msra.mxu0 %v505
    %933 = vmatprep.subr.bf16.mxu0 0
    %934 = vmatpush2.bf16.msra.mxu0 0
    %935 = vmatprep.subr.bf16.mxu0 0
    %936 = vmatpush2.bf16.msra.mxu0 0
    %937 = vmatprep.subr.bf16.mxu0 0
    %938 = vmatpush2.bf16.msra.mxu0 0
    %939 = vmatprep.subr.bf16.mxu0 0
    %940 = vmatpush2.bf16.msra.mxu0 0
    %941 = vmatprep.subr.bf16.mxu0 0
    %942 = vmatpush2.bf16.msra.mxu0 0
    %943 = vmatprep.subr.bf16.mxu0 0
    %944 = vmatpush2.bf16.msra.mxu0 0
    %945 = vmatprep.subr.bf16.mxu0 0
    %946 = vmatpush2.bf16.msra.mxu0 0
    %947 = vmatprep.subr.bf16.mxu0 0
    %948 = vmatpush2.bf16.msra.mxu0 0
    %949 = vmatprep.mubr.bf16.mxu0 0
    %950 = vmatmul.mubr.bf16.gmra.mxu0 %v916
    %v951 = vpop.f32.mrf.mxu0
    %v952 = vadd.f32 0.0, %v951
    %v953 = vpop.f32.mrf.mxu0
    %v954 = vadd.f32 0.0, %v953
    %v955 = vpop.f32.mrf.mxu0
    %v956 = vpop.f32.mrf.mxu0
    %957 = vdwg.mxu0
    %958 = vmatprep.subr.bf16.mxu0 %v536
    %959 = vmatpush1.bf16.msra.mxu0 %v535
    %960 = vmatprep.subr.bf16.mxu0 %v532
    %961 = vmatpush1.bf16.msra.mxu0 %v531
    %962 = vmatprep.subr.bf16.mxu0 %v528
    %963 = vmatpush1.bf16.msra.mxu0 %v527
    %964 = vmatprep.subr.bf16.mxu0 %v524
    %965 = vmatpush1.bf16.msra.mxu0 %v523
    %966 = vmatprep.subr.bf16.mxu0 %v520
    %967 = vmatpush1.bf16.msra.mxu0 %v519
    %968 = vmatprep.subr.bf16.mxu0 %v516
    %969 = vmatpush1.bf16.msra.mxu0 %v515
    %970 = vmatprep.subr.bf16.mxu0 %v512
    %971 = vmatpush1.bf16.msra.mxu0 %v511
    %972 = vmatprep.subr.bf16.mxu0 %v508
    %973 = vmatpush1.bf16.msra.mxu0 %v507
    %974 = vmatprep.subr.bf16.mxu0 0
    %975 = vmatpush2.bf16.msra.mxu0 0
    %976 = vmatprep.subr.bf16.mxu0 0
    %977 = vmatpush2.bf16.msra.mxu0 0
    %978 = vmatprep.subr.bf16.mxu0 0
    %979 = vmatpush2.bf16.msra.mxu0 0
    %980 = vmatprep.subr.bf16.mxu0 0
    %981 = vmatpush2.bf16.msra.mxu0 0
    %982 = vmatprep.subr.bf16.mxu0 0
    %983 = vmatpush2.bf16.msra.mxu0 0
    %984 = vmatprep.subr.bf16.mxu0 0
    %985 = vmatpush2.bf16.msra.mxu0 0
    %986 = vmatprep.subr.bf16.mxu0 0
    %987 = vmatpush2.bf16.msra.mxu0 0
    %988 = vmatprep.subr.bf16.mxu0 0
    %989 = vmatpush2.bf16.msra.mxu0 0
    %990 = vmatprep.mubr.bf16.mxu0 0
    %991 = vmatmul.mubr.bf16.gmra.mxu0 %v916
    %v992 = vpop.f32.mrf.mxu0
    %v993 = vadd.f32 0.0, %v992
    %v994 = vpop.f32.mrf.mxu0
    %v995 = vadd.f32 0.0, %v994
    %v996 = vpop.f32.mrf.mxu0
    %v997 = vpop.f32.mrf.mxu0
    %998 = vdwg.mxu0
    %v999 = vadd.f32 %v912, %v952
    %v1000 = vadd.f32 %v913, %v954
    %v1001 = vadd.f32 %v914, %v993
    %v1002 = vadd.f32 %v915, %v995
    %v1003 = vxor.u32 %v999, 2147483648
    %v1004 = vxor.u32 %v1000, 2147483648
    %v1005 = vxor.u32 %v1001, 2147483648
    %v1006 = vmul.f32 %v1003, 1.442695
    %v1007 = vpow.pop %v1006
    %v1008 = vmul.f32 %v1004, 1.442695
    %v1009 = vpow.pop %v1008
    %v1010 = vmul.f32 %v1005, 1.442695
    %v1011 = vpow.pop %v1010
    %v1012 = vadd.f32 %v1007, 1.0
    %v1013 = vadd.f32 %v1009, 1.0
    %v1014 = vadd.f32 %v1011, 1.0
    %v1015 = vrcp.pop %v1012
    %v1016 = vmul.f32 1.0, %v1015
    %v1017 = vrcp.pop %v1013
    %v1018 = vmul.f32 1.0, %v1017
    %v1019 = vrcp.pop %v1014
    %v1020 = vmul.f32 1.0, %v1019
    %v1021 = vtanh.pop %v1002
    %v1022 = vmul.f32 %v1018, %v908
    %v1023 = vmul.f32 %v1016, %v1021
    %v1024 = vadd.f32 %v1022, %v1023
    %v1025 = vtanh.pop %v1024
    %v1026 = vmul.f32 %v1020, %v1025
    %s1027 = scalar_lea.vmem [#allocation4], 128
    %v1028 = vld [vmem:[%s1027] sm:$0xff]
    %v1029 = vld [vmem:[%s1027 + $0x8] sm:$0xff]
    %v1030 = vld [vmem:[%s1027 + $0x10] sm:$0xff]
    %v1031 = vld [vmem:[%s1027 + $0x18] sm:$0xff]
    %v1032 = vpack.c.bf16 %v1026, %v1026
    %1033 = vmatprep.subr.bf16.mxu0 %v534
    %1034 = vmatpush1.bf16.msra.mxu0 %v533
    %1035 = vmatprep.subr.bf16.mxu0 %v530
    %1036 = vmatpush1.bf16.msra.mxu0 %v529
    %1037 = vmatprep.subr.bf16.mxu0 %v526
    %1038 = vmatpush1.bf16.msra.mxu0 %v525
    %1039 = vmatprep.subr.bf16.mxu0 %v522
    %1040 = vmatpush1.bf16.msra.mxu0 %v521
    %1041 = vmatprep.subr.bf16.mxu0 %v518
    %1042 = vmatpush1.bf16.msra.mxu0 %v517
    %1043 = vmatprep.subr.bf16.mxu0 %v514
    %1044 = vmatpush1.bf16.msra.mxu0 %v513
    %1045 = vmatprep.subr.bf16.mxu0 %v510
    %1046 = vmatpush1.bf16.msra.mxu0 %v509
    %1047 = vmatprep.subr.bf16.mxu0 %v506
    %1048 = vmatpush1.bf16.msra.mxu0 %v505
    %1049 = vmatprep.subr.bf16.mxu0 0
    %1050 = vmatpush2.bf16.msra.mxu0 0
    %1051 = vmatprep.subr.bf16.mxu0 0
    %1052 = vmatpush2.bf16.msra.mxu0 0
    %1053 = vmatprep.subr.bf16.mxu0 0
    %1054 = vmatpush2.bf16.msra.mxu0 0
    %1055 = vmatprep.subr.bf16.mxu0 0
    %1056 = vmatpush2.bf16.msra.mxu0 0
    %1057 = vmatprep.subr.bf16.mxu0 0
    %1058 = vmatpush2.bf16.msra.mxu0 0
    %1059 = vmatprep.subr.bf16.mxu0 0
    %1060 = vmatpush2.bf16.msra.mxu0 0
    %1061 = vmatprep.subr.bf16.mxu0 0
    %1062 = vmatpush2.bf16.msra.mxu0 0
    %1063 = vmatprep.subr.bf16.mxu0 0
    %1064 = vmatpush2.bf16.msra.mxu0 0
    %1065 = vmatprep.mubr.bf16.mxu0 0
    %1066 = vmatmul.mubr.bf16.gmra.mxu0 %v1032
    %v1067 = vpop.f32.mrf.mxu0
    %v1068 = vadd.f32 0.0, %v1067
    %v1069 = vpop.f32.mrf.mxu0
    %v1070 = vadd.f32 0.0, %v1069
    %v1071 = vpop.f32.mrf.mxu0
    %v1072 = vpop.f32.mrf.mxu0
    %1073 = vdwg.mxu0
    %1074 = vmatprep.subr.bf16.mxu0 %v536
    %1075 = vmatpush1.bf16.msra.mxu0 %v535
    %1076 = vmatprep.subr.bf16.mxu0 %v532
    %1077 = vmatpush1.bf16.msra.mxu0 %v531
    %1078 = vmatprep.subr.bf16.mxu0 %v528
    %1079 = vmatpush1.bf16.msra.mxu0 %v527
    %1080 = vmatprep.subr.bf16.mxu0 %v524
    %1081 = vmatpush1.bf16.msra.mxu0 %v523
    %1082 = vmatprep.subr.bf16.mxu0 %v520
    %1083 = vmatpush1.bf16.msra.mxu0 %v519
    %1084 = vmatprep.subr.bf16.mxu0 %v516
    %1085 = vmatpush1.bf16.msra.mxu0 %v515
    %1086 = vmatprep.subr.bf16.mxu0 %v512
    %1087 = vmatpush1.bf16.msra.mxu0 %v511
    %1088 = vmatprep.subr.bf16.mxu0 %v508
    %1089 = vmatpush1.bf16.msra.mxu0 %v507
    %1090 = vmatprep.subr.bf16.mxu0 0
    %1091 = vmatpush2.bf16.msra.mxu0 0
    %1092 = vmatprep.subr.bf16.mxu0 0
    %1093 = vmatpush2.bf16.msra.mxu0 0
    %1094 = vmatprep.subr.bf16.mxu0 0
    %1095 = vmatpush2.bf16.msra.mxu0 0
    %1096 = vmatprep.subr.bf16.mxu0 0
    %1097 = vmatpush2.bf16.msra.mxu0 0
    %1098 = vmatprep.subr.bf16.mxu0 0
    %1099 = vmatpush2.bf16.msra.mxu0 0
    %1100 = vmatprep.subr.bf16.mxu0 0
    %1101 = vmatpush2.bf16.msra.mxu0 0
    %1102 = vmatprep.subr.bf16.mxu0 0
    %1103 = vmatpush2.bf16.msra.mxu0 0
    %1104 = vmatprep.subr.bf16.mxu0 0
    %1105 = vmatpush2.bf16.msra.mxu0 0
    %1106 = vmatprep.mubr.bf16.mxu0 0
    %1107 = vmatmul.mubr.bf16.gmra.mxu0 %v1032
    %v1108 = vpop.f32.mrf.mxu0
    %v1109 = vadd.f32 0.0, %v1108
    %v1110 = vpop.f32.mrf.mxu0
    %v1111 = vadd.f32 0.0, %v1110
    %v1112 = vpop.f32.mrf.mxu0
    %v1113 = vpop.f32.mrf.mxu0
    %1114 = vdwg.mxu0
    %v1115 = vadd.f32 %v1028, %v1068
    %v1116 = vadd.f32 %v1029, %v1070
    %v1117 = vadd.f32 %v1030, %v1109
    %v1118 = vadd.f32 %v1031, %v1111
    %v1119 = vxor.u32 %v1115, 2147483648
    %v1120 = vxor.u32 %v1116, 2147483648
    %v1121 = vxor.u32 %v1117, 2147483648
    %v1122 = vmul.f32 %v1119, 1.442695
    %v1123 = vpow.pop %v1122
    %v1124 = vmul.f32 %v1120, 1.442695
    %v1125 = vpow.pop %v1124
    %v1126 = vmul.f32 %v1121, 1.442695
    %v1127 = vpow.pop %v1126
    %v1128 = vadd.f32 %v1123, 1.0
    %v1129 = vadd.f32 %v1125, 1.0
    %v1130 = vadd.f32 %v1127, 1.0
    %v1131 = vrcp.pop %v1128
    %v1132 = vmul.f32 1.0, %v1131
    %v1133 = vrcp.pop %v1129
    %v1134 = vmul.f32 1.0, %v1133
    %v1135 = vrcp.pop %v1130
    %v1136 = vmul.f32 1.0, %v1135
    %v1137 = vtanh.pop %v1118
    %v1138 = vmul.f32 %v1134, %v1024
    %v1139 = vmul.f32 %v1132, %v1137
    %v1140 = vadd.f32 %v1138, %v1139
    %v1141 = vtanh.pop %v1140
    %v1142 = vmul.f32 %v1136, %v1141
    %s1143 = scalar_lea.vmem [#allocation4], 160
    %v1144 = vld [vmem:[%s1143] sm:$0xff]
    %v1145 = vld [vmem:[%s1143 + $0x8] sm:$0xff]
    %v1146 = vld [vmem:[%s1143 + $0x10] sm:$0xff]
    %v1147 = vld [vmem:[%s1143 + $0x18] sm:$0xff]
    %v1148 = vpack.c.bf16 %v1142, %v1142
    %1149 = vmatprep.subr.bf16.mxu0 %v534
    %1150 = vmatpush1.bf16.msra.mxu0 %v533
    %1151 = vmatprep.subr.bf16.mxu0 %v530
    %1152 = vmatpush1.bf16.msra.mxu0 %v529
    %1153 = vmatprep.subr.bf16.mxu0 %v526
    %1154 = vmatpush1.bf16.msra.mxu0 %v525
    %1155 = vmatprep.subr.bf16.mxu0 %v522
    %1156 = vmatpush1.bf16.msra.mxu0 %v521
    %1157 = vmatprep.subr.bf16.mxu0 %v518
    %1158 = vmatpush1.bf16.msra.mxu0 %v517
    %1159 = vmatprep.subr.bf16.mxu0 %v514
    %1160 = vmatpush1.bf16.msra.mxu0 %v513
    %1161 = vmatprep.subr.bf16.mxu0 %v510
    %1162 = vmatpush1.bf16.msra.mxu0 %v509
    %1163 = vmatprep.subr.bf16.mxu0 %v506
    %1164 = vmatpush1.bf16.msra.mxu0 %v505
    %1165 = vmatprep.subr.bf16.mxu0 0
    %1166 = vmatpush2.bf16.msra.mxu0 0
    %1167 = vmatprep.subr.bf16.mxu0 0
    %1168 = vmatpush2.bf16.msra.mxu0 0
    %1169 = vmatprep.subr.bf16.mxu0 0
    %1170 = vmatpush2.bf16.msra.mxu0 0
    %1171 = vmatprep.subr.bf16.mxu0 0
    %1172 = vmatpush2.bf16.msra.mxu0 0
    %1173 = vmatprep.subr.bf16.mxu0 0
    %1174 = vmatpush2.bf16.msra.mxu0 0
    %1175 = vmatprep.subr.bf16.mxu0 0
    %1176 = vmatpush2.bf16.msra.mxu0 0
    %1177 = vmatprep.subr.bf16.mxu0 0
    %1178 = vmatpush2.bf16.msra.mxu0 0
    %1179 = vmatprep.subr.bf16.mxu0 0
    %1180 = vmatpush2.bf16.msra.mxu0 0
    %1181 = vmatprep.mubr.bf16.mxu0 0
    %1182 = vmatmul.mubr.bf16.gmra.mxu0 %v1148
    %v1183 = vpop.f32.mrf.mxu0
    %v1184 = vadd.f32 0.0, %v1183
    %v1185 = vpop.f32.mrf.mxu0
    %v1186 = vadd.f32 0.0, %v1185
    %v1187 = vpop.f32.mrf.mxu0
    %v1188 = vpop.f32.mrf.mxu0
    %1189 = vdwg.mxu0
    %1190 = vmatprep.subr.bf16.mxu0 %v536
    %1191 = vmatpush1.bf16.msra.mxu0 %v535
    %1192 = vmatprep.subr.bf16.mxu0 %v532
    %1193 = vmatpush1.bf16.msra.mxu0 %v531
    %1194 = vmatprep.subr.bf16.mxu0 %v528
    %1195 = vmatpush1.bf16.msra.mxu0 %v527
    %1196 = vmatprep.subr.bf16.mxu0 %v524
    %1197 = vmatpush1.bf16.msra.mxu0 %v523
    %1198 = vmatprep.subr.bf16.mxu0 %v520
    %1199 = vmatpush1.bf16.msra.mxu0 %v519
    %1200 = vmatprep.subr.bf16.mxu0 %v516
    %1201 = vmatpush1.bf16.msra.mxu0 %v515
    %1202 = vmatprep.subr.bf16.mxu0 %v512
    %1203 = vmatpush1.bf16.msra.mxu0 %v511
    %1204 = vmatprep.subr.bf16.mxu0 %v508
    %1205 = vmatpush1.bf16.msra.mxu0 %v507
    %1206 = vmatprep.subr.bf16.mxu0 0
    %1207 = vmatpush2.bf16.msra.mxu0 0
    %1208 = vmatprep.subr.bf16.mxu0 0
    %1209 = vmatpush2.bf16.msra.mxu0 0
    %1210 = vmatprep.subr.bf16.mxu0 0
    %1211 = vmatpush2.bf16.msra.mxu0 0
    %1212 = vmatprep.subr.bf16.mxu0 0
    %1213 = vmatpush2.bf16.msra.mxu0 0
    %1214 = vmatprep.subr.bf16.mxu0 0
    %1215 = vmatpush2.bf16.msra.mxu0 0
    %1216 = vmatprep.subr.bf16.mxu0 0
    %1217 = vmatpush2.bf16.msra.mxu0 0
    %1218 = vmatprep.subr.bf16.mxu0 0
    %1219 = vmatpush2.bf16.msra.mxu0 0
    %1220 = vmatprep.subr.bf16.mxu0 0
    %1221 = vmatpush2.bf16.msra.mxu0 0
    %1222 = vmatprep.mubr.bf16.mxu0 0
    %1223 = vmatmul.mubr.bf16.gmra.mxu0 %v1148
    %v1224 = vpop.f32.mrf.mxu0
    %v1225 = vadd.f32 0.0, %v1224
    %v1226 = vpop.f32.mrf.mxu0
    %v1227 = vadd.f32 0.0, %v1226
    %v1228 = vpop.f32.mrf.mxu0
    %v1229 = vpop.f32.mrf.mxu0
    %1230 = vdwg.mxu0
    %v1231 = vadd.f32 %v1144, %v1184
    %v1232 = vadd.f32 %v1145, %v1186
    %v1233 = vadd.f32 %v1146, %v1225
    %v1234 = vadd.f32 %v1147, %v1227
    %v1235 = vxor.u32 %v1231, 2147483648
    %v1236 = vxor.u32 %v1232, 2147483648
    %v1237 = vxor.u32 %v1233, 2147483648
    %v1238 = vmul.f32 %v1235, 1.442695
    %v1239 = vpow.pop %v1238
    %v1240 = vmul.f32 %v1236, 1.442695
    %v1241 = vpow.pop %v1240
    %v1242 = vmul.f32 %v1237, 1.442695
    %v1243 = vpow.pop %v1242
    %v1244 = vadd.f32 %v1239, 1.0
    %v1245 = vadd.f32 %v1241, 1.0
    %v1246 = vadd.f32 %v1243, 1.0
    %v1247 = vrcp.pop %v1244
    %v1248 = vmul.f32 1.0, %v1247
    %v1249 = vrcp.pop %v1245
    %v1250 = vmul.f32 1.0, %v1249
    %v1251 = vrcp.pop %v1246
    %v1252 = vmul.f32 1.0, %v1251
    %v1253 = vtanh.pop %v1234
    %v1254 = vmul.f32 %v1250, %v1140
    %v1255 = vmul.f32 %v1248, %v1253
    %v1256 = vadd.f32 %v1254, %v1255
    %v1257 = vtanh.pop %v1256
    %v1258 = vmul.f32 %v1252, %v1257
    %s1259 = scalar_lea.vmem [#allocation4], 192
    %v1260 = vld [vmem:[%s1259] sm:$0xff]
    %v1261 = vld [vmem:[%s1259 + $0x8] sm:$0xff]
    %v1262 = vld [vmem:[%s1259 + $0x10] sm:$0xff]
    %v1263 = vld [vmem:[%s1259 + $0x18] sm:$0xff]
    %v1264 = vpack.c.bf16 %v1258, %v1258
    %1265 = vmatprep.subr.bf16.mxu0 %v534
    %1266 = vmatpush1.bf16.msra.mxu0 %v533
    %1267 = vmatprep.subr.bf16.mxu0 %v530
    %1268 = vmatpush1.bf16.msra.mxu0 %v529
    %1269 = vmatprep.subr.bf16.mxu0 %v526
    %1270 = vmatpush1.bf16.msra.mxu0 %v525
    %1271 = vmatprep.subr.bf16.mxu0 %v522
    %1272 = vmatpush1.bf16.msra.mxu0 %v521
    %1273 = vmatprep.subr.bf16.mxu0 %v518
    %1274 = vmatpush1.bf16.msra.mxu0 %v517
    %1275 = vmatprep.subr.bf16.mxu0 %v514
    %1276 = vmatpush1.bf16.msra.mxu0 %v513
    %1277 = vmatprep.subr.bf16.mxu0 %v510
    %1278 = vmatpush1.bf16.msra.mxu0 %v509
    %1279 = vmatprep.subr.bf16.mxu0 %v506
    %1280 = vmatpush1.bf16.msra.mxu0 %v505
    %1281 = vmatprep.subr.bf16.mxu0 0
    %1282 = vmatpush2.bf16.msra.mxu0 0
    %1283 = vmatprep.subr.bf16.mxu0 0
    %1284 = vmatpush2.bf16.msra.mxu0 0
    %1285 = vmatprep.subr.bf16.mxu0 0
    %1286 = vmatpush2.bf16.msra.mxu0 0
    %1287 = vmatprep.subr.bf16.mxu0 0
    %1288 = vmatpush2.bf16.msra.mxu0 0
    %1289 = vmatprep.subr.bf16.mxu0 0
    %1290 = vmatpush2.bf16.msra.mxu0 0
    %1291 = vmatprep.subr.bf16.mxu0 0
    %1292 = vmatpush2.bf16.msra.mxu0 0
    %1293 = vmatprep.subr.bf16.mxu0 0
    %1294 = vmatpush2.bf16.msra.mxu0 0
    %1295 = vmatprep.subr.bf16.mxu0 0
    %1296 = vmatpush2.bf16.msra.mxu0 0
    %1297 = vmatprep.mubr.bf16.mxu0 0
    %1298 = vmatmul.mubr.bf16.gmra.mxu0 %v1264
    %v1299 = vpop.f32.mrf.mxu0
    %v1300 = vadd.f32 0.0, %v1299
    %v1301 = vpop.f32.mrf.mxu0
    %v1302 = vadd.f32 0.0, %v1301
    %v1303 = vpop.f32.mrf.mxu0
    %v1304 = vpop.f32.mrf.mxu0
    %1305 = vdwg.mxu0
    %1306 = vmatprep.subr.bf16.mxu0 %v536
    %1307 = vmatpush1.bf16.msra.mxu0 %v535
    %1308 = vmatprep.subr.bf16.mxu0 %v532
    %1309 = vmatpush1.bf16.msra.mxu0 %v531
    %1310 = vmatprep.subr.bf16.mxu0 %v528
    %1311 = vmatpush1.bf16.msra.mxu0 %v527
    %1312 = vmatprep.subr.bf16.mxu0 %v524
    %1313 = vmatpush1.bf16.msra.mxu0 %v523
    %1314 = vmatprep.subr.bf16.mxu0 %v520
    %1315 = vmatpush1.bf16.msra.mxu0 %v519
    %1316 = vmatprep.subr.bf16.mxu0 %v516
    %1317 = vmatpush1.bf16.msra.mxu0 %v515
    %1318 = vmatprep.subr.bf16.mxu0 %v512
    %1319 = vmatpush1.bf16.msra.mxu0 %v511
    %1320 = vmatprep.subr.bf16.mxu0 %v508
    %1321 = vmatpush1.bf16.msra.mxu0 %v507
    %1322 = vmatprep.subr.bf16.mxu0 0
    %1323 = vmatpush2.bf16.msra.mxu0 0
    %1324 = vmatprep.subr.bf16.mxu0 0
    %1325 = vmatpush2.bf16.msra.mxu0 0
    %1326 = vmatprep.subr.bf16.mxu0 0
    %1327 = vmatpush2.bf16.msra.mxu0 0
    %1328 = vmatprep.subr.bf16.mxu0 0
    %1329 = vmatpush2.bf16.msra.mxu0 0
    %1330 = vmatprep.subr.bf16.mxu0 0
    %1331 = vmatpush2.bf16.msra.mxu0 0
    %1332 = vmatprep.subr.bf16.mxu0 0
    %1333 = vmatpush2.bf16.msra.mxu0 0
    %1334 = vmatprep.subr.bf16.mxu0 0
    %1335 = vmatpush2.bf16.msra.mxu0 0
    %1336 = vmatprep.subr.bf16.mxu0 0
    %1337 = vmatpush2.bf16.msra.mxu0 0
    %1338 = vmatprep.mubr.bf16.mxu0 0
    %1339 = vmatmul.mubr.bf16.gmra.mxu0 %v1264
    %v1340 = vpop.f32.mrf.mxu0
    %v1341 = vadd.f32 0.0, %v1340
    %v1342 = vpop.f32.mrf.mxu0
    %v1343 = vadd.f32 0.0, %v1342
    %v1344 = vpop.f32.mrf.mxu0
    %v1345 = vpop.f32.mrf.mxu0
    %1346 = vdwg.mxu0
    %v1347 = vadd.f32 %v1260, %v1300
    %v1348 = vadd.f32 %v1261, %v1302
    %v1349 = vadd.f32 %v1262, %v1341
    %v1350 = vadd.f32 %v1263, %v1343
    %v1351 = vxor.u32 %v1347, 2147483648
    %v1352 = vxor.u32 %v1348, 2147483648
    %v1353 = vxor.u32 %v1349, 2147483648
    %v1354 = vmul.f32 %v1351, 1.442695
    %v1355 = vpow.pop %v1354
    %v1356 = vmul.f32 %v1352, 1.442695
    %v1357 = vpow.pop %v1356
    %v1358 = vmul.f32 %v1353, 1.442695
    %v1359 = vpow.pop %v1358
    %v1360 = vadd.f32 %v1355, 1.0
    %v1361 = vadd.f32 %v1357, 1.0
    %v1362 = vadd.f32 %v1359, 1.0
    %v1363 = vrcp.pop %v1360
    %v1364 = vmul.f32 1.0, %v1363
    %v1365 = vrcp.pop %v1361
    %v1366 = vmul.f32 1.0, %v1365
    %v1367 = vrcp.pop %v1362
    %v1368 = vmul.f32 1.0, %v1367
    %v1369 = vtanh.pop %v1350
    %v1370 = vmul.f32 %v1366, %v1256
    %v1371 = vmul.f32 %v1364, %v1369
    %v1372 = vadd.f32 %v1370, %v1371
    %v1373 = vtanh.pop %v1372
    %v1374 = vmul.f32 %v1368, %v1373
    %s1375 = scalar_lea.vmem [#allocation4], 224
    %v1376 = vld [vmem:[%s1375] sm:$0xff]
    %v1377 = vld [vmem:[%s1375 + $0x8] sm:$0xff]
    %v1378 = vld [vmem:[%s1375 + $0x10] sm:$0xff]
    %v1379 = vld [vmem:[%s1375 + $0x18] sm:$0xff]
    %v1380 = vpack.c.bf16 %v1374, %v1374
    %1381 = vmatprep.subr.bf16.mxu0 %v534
    %1382 = vmatpush1.bf16.msra.mxu0 %v533
    %1383 = vmatprep.subr.bf16.mxu0 %v530
    %1384 = vmatpush1.bf16.msra.mxu0 %v529
    %1385 = vmatprep.subr.bf16.mxu0 %v526
    %1386 = vmatpush1.bf16.msra.mxu0 %v525
    %1387 = vmatprep.subr.bf16.mxu0 %v522
    %1388 = vmatpush1.bf16.msra.mxu0 %v521
    %1389 = vmatprep.subr.bf16.mxu0 %v518
    %1390 = vmatpush1.bf16.msra.mxu0 %v517
    %1391 = vmatprep.subr.bf16.mxu0 %v514
    %1392 = vmatpush1.bf16.msra.mxu0 %v513
    %1393 = vmatprep.subr.bf16.mxu0 %v510
    %1394 = vmatpush1.bf16.msra.mxu0 %v509
    %1395 = vmatprep.subr.bf16.mxu0 %v506
    %1396 = vmatpush1.bf16.msra.mxu0 %v505
    %1397 = vmatprep.subr.bf16.mxu0 0
    %1398 = vmatpush2.bf16.msra.mxu0 0
    %1399 = vmatprep.subr.bf16.mxu0 0
    %1400 = vmatpush2.bf16.msra.mxu0 0
    %1401 = vmatprep.subr.bf16.mxu0 0
    %1402 = vmatpush2.bf16.msra.mxu0 0
    %1403 = vmatprep.subr.bf16.mxu0 0
    %1404 = vmatpush2.bf16.msra.mxu0 0
    %1405 = vmatprep.subr.bf16.mxu0 0
    %1406 = vmatpush2.bf16.msra.mxu0 0
    %1407 = vmatprep.subr.bf16.mxu0 0
    %1408 = vmatpush2.bf16.msra.mxu0 0
    %1409 = vmatprep.subr.bf16.mxu0 0
    %1410 = vmatpush2.bf16.msra.mxu0 0
    %1411 = vmatprep.subr.bf16.mxu0 0
    %1412 = vmatpush2.bf16.msra.mxu0 0
    %1413 = vmatprep.mubr.bf16.mxu0 0
    %1414 = vmatmul.mubr.bf16.gmra.mxu0 %v1380
    %v1415 = vpop.f32.mrf.mxu0
    %v1416 = vadd.f32 0.0, %v1415
    %v1417 = vpop.f32.mrf.mxu0
    %v1418 = vadd.f32 0.0, %v1417
    %v1419 = vpop.f32.mrf.mxu0
    %v1420 = vpop.f32.mrf.mxu0
    %1421 = vdwg.mxu0
    %1422 = vmatprep.subr.bf16.mxu0 %v536
    %1423 = vmatpush1.bf16.msra.mxu0 %v535
    %1424 = vmatprep.subr.bf16.mxu0 %v532
    %1425 = vmatpush1.bf16.msra.mxu0 %v531
    %1426 = vmatprep.subr.bf16.mxu0 %v528
    %1427 = vmatpush1.bf16.msra.mxu0 %v527
    %1428 = vmatprep.subr.bf16.mxu0 %v524
    %1429 = vmatpush1.bf16.msra.mxu0 %v523
    %1430 = vmatprep.subr.bf16.mxu0 %v520
    %1431 = vmatpush1.bf16.msra.mxu0 %v519
    %1432 = vmatprep.subr.bf16.mxu0 %v516
    %1433 = vmatpush1.bf16.msra.mxu0 %v515
    %1434 = vmatprep.subr.bf16.mxu0 %v512
    %1435 = vmatpush1.bf16.msra.mxu0 %v511
    %1436 = vmatprep.subr.bf16.mxu0 %v508
    %1437 = vmatpush1.bf16.msra.mxu0 %v507
    %1438 = vmatprep.subr.bf16.mxu0 0
    %1439 = vmatpush2.bf16.msra.mxu0 0
    %1440 = vmatprep.subr.bf16.mxu0 0
    %1441 = vmatpush2.bf16.msra.mxu0 0
    %1442 = vmatprep.subr.bf16.mxu0 0
    %1443 = vmatpush2.bf16.msra.mxu0 0
    %1444 = vmatprep.subr.bf16.mxu0 0
    %1445 = vmatpush2.bf16.msra.mxu0 0
    %1446 = vmatprep.subr.bf16.mxu0 0
    %1447 = vmatpush2.bf16.msra.mxu0 0
    %1448 = vmatprep.subr.bf16.mxu0 0
    %1449 = vmatpush2.bf16.msra.mxu0 0
    %1450 = vmatprep.subr.bf16.mxu0 0
    %1451 = vmatpush2.bf16.msra.mxu0 0
    %1452 = vmatprep.subr.bf16.mxu0 0
    %1453 = vmatpush2.bf16.msra.mxu0 0
    %1454 = vmatprep.mubr.bf16.mxu0 0
    %1455 = vmatmul.mubr.bf16.gmra.mxu0 %v1380
    %v1456 = vpop.f32.mrf.mxu0
    %v1457 = vadd.f32 0.0, %v1456
    %v1458 = vpop.f32.mrf.mxu0
    %v1459 = vadd.f32 0.0, %v1458
    %v1460 = vpop.f32.mrf.mxu0
    %v1461 = vpop.f32.mrf.mxu0
    %1462 = vdwg.mxu0
    %v1463 = vadd.f32 %v1376, %v1416
    %v1464 = vadd.f32 %v1377, %v1418
    %v1465 = vadd.f32 %v1378, %v1457
    %v1466 = vadd.f32 %v1379, %v1459
    %v1467 = vxor.u32 %v1463, 2147483648
    %v1468 = vxor.u32 %v1464, 2147483648
    %v1469 = vxor.u32 %v1465, 2147483648
    %v1470 = vmul.f32 %v1467, 1.442695
    %v1471 = vpow.pop %v1470
    %v1472 = vmul.f32 %v1468, 1.442695
    %v1473 = vpow.pop %v1472
    %v1474 = vmul.f32 %v1469, 1.442695
    %v1475 = vpow.pop %v1474
    %v1476 = vadd.f32 %v1471, 1.0
    %v1477 = vadd.f32 %v1473, 1.0
    %v1478 = vadd.f32 %v1475, 1.0
    %v1479 = vrcp.pop %v1476
    %v1480 = vmul.f32 1.0, %v1479
    %v1481 = vrcp.pop %v1477
    %v1482 = vmul.f32 1.0, %v1481
    %v1483 = vrcp.pop %v1478
    %v1484 = vmul.f32 1.0, %v1483
    %v1485 = vtanh.pop %v1466
    %v1486 = vmul.f32 %v1482, %v1372
    %v1487 = vmul.f32 %v1480, %v1485
    %v1488 = vadd.f32 %v1486, %v1487
    %v1489 = vtanh.pop %v1488
    %v1490 = vmul.f32 %v1484, %v1489
    %1491 = vst [vmem:[#allocation2] sm:$0xff] %v1490
    %1492 = vst [vmem:[#allocation3] sm:$0xff] %v1488
    // Predicated region
    $region58: #{tpu_custom_call.1} parent=1 // pred_check
      %p1493 = pneg %p99
    $region59: #{tpu_custom_call.1} parent=1 // pred_check_branch
      %1495 = sbr.rel (%p1493) target = $region61
    $region60: #{tpu_custom_call.1} parent=1 // pred_region
      %v1496 = vpack.c.bf16 %v1490, %v1490
      %v1497 = vld [vmem:[#allocation11] sm:$0xf]
      %v1498 = vld [vmem:[#allocation11 + $0x4] sm:$0xf]
      %v1499 = vld [vmem:[#allocation11 + $0x8] sm:$0xf]
      %v1500 = vld [vmem:[#allocation11 + $0xc] sm:$0xf]
      %v1501 = vld [vmem:[#allocation11 + $0x10] sm:$0xf]
      %v1502 = vld [vmem:[#allocation11 + $0x14] sm:$0xf]
      %v1503 = vld [vmem:[#allocation11 + $0x18] sm:$0xf]
      %v1504 = vld [vmem:[#allocation11 + $0x1c] sm:$0xf]
      %v1505 = vld [vmem:[#allocation11 + $0x20] sm:$0xf]
      %v1506 = vld [vmem:[#allocation11 + $0x24] sm:$0xf]
      %v1507 = vld [vmem:[#allocation11 + $0x28] sm:$0xf]
      %v1508 = vld [vmem:[#allocation11 + $0x2c] sm:$0xf]
      %v1509 = vld [vmem:[#allocation11 + $0x30] sm:$0xf]
      %v1510 = vld [vmem:[#allocation11 + $0x34] sm:$0xf]
      %v1511 = vld [vmem:[#allocation11 + $0x38] sm:$0xf]
      %v1512 = vld [vmem:[#allocation11 + $0x3c] sm:$0xf]
      %v1513 = vld [vmem:[%s5] sm:$0x1]
      %v1515 = vlaneseq
      %v1516 = vshrl.u32 %v1515, 7
      %v1517 = vsub.s32 0, %v1516
      %v1518 = vrot.slane %v1513, %v1517
      %v1536 = vunpack.c.l.b16 %v1497
      %v1537 = vunpack.c.l.b16 %v1498
      %v1538 = vunpack.c.l.b16 %v1499
      %v1539 = vunpack.c.l.b16 %v1500
      %v1540 = vunpack.c.l.b16 %v1501
      %v1541 = vunpack.c.l.b16 %v1502
      %v1542 = vunpack.c.l.b16 %v1503
      %v1543 = vunpack.c.l.b16 %v1504
      %v1544 = vunpack.c.l.b16 %v1505
      %v1545 = vunpack.c.l.b16 %v1506
      %v1546 = vunpack.c.l.b16 %v1507
      %v1547 = vunpack.c.l.b16 %v1508
      %v1548 = vunpack.c.l.b16 %v1509
      %v1549 = vunpack.c.l.b16 %v1510
      %v1550 = vunpack.c.l.b16 %v1511
      %v1551 = vunpack.c.l.b16 %v1512
      %v1552 = vpack.c.b16 %v1537, %v1536
      %v1553 = vpack.c.b16 %v1539, %v1538
      %v1554 = vpack.c.b16 %v1541, %v1540
      %v1555 = vpack.c.b16 %v1543, %v1542
      %v1556 = vpack.c.b16 %v1545, %v1544
      %v1557 = vpack.c.b16 %v1547, %v1546
      %v1558 = vpack.c.b16 %v1549, %v1548
      %v1559 = vpack.c.b16 %v1551, %v1550
      %1568 = vmatprep.subr.bf16.mxu0 0
      %1569 = vmatpush1.bf16.msra.mxu0 %v1559
      %1570 = vmatprep.subr.bf16.mxu0 0
      %1571 = vmatpush1.bf16.msra.mxu0 %v1558
      %1572 = vmatprep.subr.bf16.mxu0 0
      %1573 = vmatpush1.bf16.msra.mxu0 %v1557
      %1574 = vmatprep.subr.bf16.mxu0 0
      %1575 = vmatpush1.bf16.msra.mxu0 %v1556
      %1576 = vmatprep.subr.bf16.mxu0 0
      %1577 = vmatpush1.bf16.msra.mxu0 %v1555
      %1578 = vmatprep.subr.bf16.mxu0 0
      %1579 = vmatpush1.bf16.msra.mxu0 %v1554
      %1580 = vmatprep.subr.bf16.mxu0 0
      %1581 = vmatpush1.bf16.msra.mxu0 %v1553
      %1582 = vmatprep.subr.bf16.mxu0 0
      %1583 = vmatpush1.bf16.msra.mxu0 %v1552
      %1584 = vmatprep.subr.bf16.mxu0 0
      %1585 = vmatpush2.bf16.msra.mxu0 0
      %1586 = vmatprep.subr.bf16.mxu0 0
      %1587 = vmatpush2.bf16.msra.mxu0 0
      %1588 = vmatprep.subr.bf16.mxu0 0
      %1589 = vmatpush2.bf16.msra.mxu0 0
      %1590 = vmatprep.subr.bf16.mxu0 0
      %1591 = vmatpush2.bf16.msra.mxu0 0
      %1592 = vmatprep.subr.bf16.mxu0 0
      %1593 = vmatpush2.bf16.msra.mxu0 0
      %1594 = vmatprep.subr.bf16.mxu0 0
      %1595 = vmatpush2.bf16.msra.mxu0 0
      %1596 = vmatprep.subr.bf16.mxu0 0
      %1597 = vmatpush2.bf16.msra.mxu0 0
      %1598 = vmatprep.subr.bf16.mxu0 0
      %1599 = vmatpush2.bf16.msra.mxu0 0
      %1600 = vmatprep.mubr.bf16.mxu0 0
      %1601 = vmatmul.mubr.bf16.gmra.mxu0 %v1496
      %v1602 = vpop.f32.mrf.mxu0
      %v1603 = vadd.f32 %v1518, %v1602
      %v1604 = vpop.f32.mrf.mxu0
      %v1605 = vpop.f32.mrf.mxu0
      %v1606 = vpop.f32.mrf.mxu0
      %1607 = vdwg.mxu0
      %v1608 = vmax.f32 %v1603, 0.0
      %v1609 = vpack.c.bf16 %v1608, %v1608
      %v1610 = vld [vmem:[#allocation13] sm:$0xf]
      %v1611 = vld [vmem:[#allocation13 + $0x4] sm:$0xf]
      %v1612 = vld [vmem:[#allocation13 + $0x8] sm:$0xf]
      %v1613 = vld [vmem:[#allocation13 + $0xc] sm:$0xf]
      %v1614 = vld [vmem:[#allocation13 + $0x10] sm:$0xf]
      %v1615 = vld [vmem:[#allocation13 + $0x14] sm:$0xf]
      %v1616 = vld [vmem:[#allocation13 + $0x18] sm:$0xf]
      %v1617 = vld [vmem:[#allocation13 + $0x1c] sm:$0xf]
      %v1618 = vld [vmem:[#allocation13 + $0x20] sm:$0xf]
      %v1619 = vld [vmem:[#allocation13 + $0x24] sm:$0xf]
      %v1620 = vld [vmem:[#allocation13 + $0x28] sm:$0xf]
      %v1621 = vld [vmem:[#allocation13 + $0x2c] sm:$0xf]
      %v1622 = vld [vmem:[#allocation13 + $0x30] sm:$0xf]
      %v1623 = vld [vmem:[#allocation13 + $0x34] sm:$0xf]
      %v1624 = vld [vmem:[#allocation13 + $0x38] sm:$0xf]
      %v1625 = vld [vmem:[#allocation13 + $0x3c] sm:$0xf]
      %v1626 = vld [vmem:[%s7] sm:$0x1]
      %v1628 = vlaneseq
      %v1629 = vshrl.u32 %v1628, 7
      %v1630 = vsub.s32 0, %v1629
      %v1631 = vrot.slane %v1626, %v1630
      %v1649 = vunpack.c.l.b16 %v1610
      %v1650 = vunpack.c.l.b16 %v1611
      %v1651 = vunpack.c.l.b16 %v1612
      %v1652 = vunpack.c.l.b16 %v1613
      %v1653 = vunpack.c.l.b16 %v1614
      %v1654 = vunpack.c.l.b16 %v1615
      %v1655 = vunpack.c.l.b16 %v1616
      %v1656 = vunpack.c.l.b16 %v1617
      %v1657 = vunpack.c.l.b16 %v1618
      %v1658 = vunpack.c.l.b16 %v1619
      %v1659 = vunpack.c.l.b16 %v1620
      %v1660 = vunpack.c.l.b16 %v1621
      %v1661 = vunpack.c.l.b16 %v1622
      %v1662 = vunpack.c.l.b16 %v1623
      %v1663 = vunpack.c.l.b16 %v1624
      %v1664 = vunpack.c.l.b16 %v1625
      %v1665 = vpack.c.b16 %v1650, %v1649
      %v1666 = vpack.c.b16 %v1652, %v1651
      %v1667 = vpack.c.b16 %v1654, %v1653
      %v1668 = vpack.c.b16 %v1656, %v1655
      %v1669 = vpack.c.b16 %v1658, %v1657
      %v1670 = vpack.c.b16 %v1660, %v1659
      %v1671 = vpack.c.b16 %v1662, %v1661
      %v1672 = vpack.c.b16 %v1664, %v1663
      %1681 = vmatprep.subr.bf16.mxu0 0
      %1682 = vmatpush1.bf16.msra.mxu0 %v1672
      %1683 = vmatprep.subr.bf16.mxu0 0
      %1684 = vmatpush1.bf16.msra.mxu0 %v1671
      %1685 = vmatprep.subr.bf16.mxu0 0
      %1686 = vmatpush1.bf16.msra.mxu0 %v1670
      %1687 = vmatprep.subr.bf16.mxu0 0
      %1688 = vmatpush1.bf16.msra.mxu0 %v1669
      %1689 = vmatprep.subr.bf16.mxu0 0
      %1690 = vmatpush1.bf16.msra.mxu0 %v1668
      %1691 = vmatprep.subr.bf16.mxu0 0
      %1692 = vmatpush1.bf16.msra.mxu0 %v1667
      %1693 = vmatprep.subr.bf16.mxu0 0
      %1694 = vmatpush1.bf16.msra.mxu0 %v1666
      %1695 = vmatprep.subr.bf16.mxu0 0
      %1696 = vmatpush1.bf16.msra.mxu0 %v1665
      %1697 = vmatprep.subr.bf16.mxu0 0
      %1698 = vmatpush2.bf16.msra.mxu0 0
      %1699 = vmatprep.subr.bf16.mxu0 0
      %1700 = vmatpush2.bf16.msra.mxu0 0
      %1701 = vmatprep.subr.bf16.mxu0 0
      %1702 = vmatpush2.bf16.msra.mxu0 0
      %1703 = vmatprep.subr.bf16.mxu0 0
      %1704 = vmatpush2.bf16.msra.mxu0 0
      %1705 = vmatprep.subr.bf16.mxu0 0
      %1706 = vmatpush2.bf16.msra.mxu0 0
      %1707 = vmatprep.subr.bf16.mxu0 0
      %1708 = vmatpush2.bf16.msra.mxu0 0
      %1709 = vmatprep.subr.bf16.mxu0 0
      %1710 = vmatpush2.bf16.msra.mxu0 0
      %1711 = vmatprep.subr.bf16.mxu0 0
      %1712 = vmatpush2.bf16.msra.mxu0 0
      %1713 = vmatprep.mubr.bf16.mxu0 0
      %1714 = vmatmul.mubr.bf16.gmra.mxu0 %v1609
      %v1715 = vpop.f32.mrf.mxu0
      %v1716 = vadd.f32 %v1631, %v1715
      %v1717 = vpop.f32.mrf.mxu0
      %v1718 = vpop.f32.mrf.mxu0
      %v1719 = vpop.f32.mrf.mxu0
      %1720 = vdwg.mxu0
      %1721 = vst [vmem:[#allocation14] sm:$0xff] %v1716
    $region61: #{tpu_custom_call.1} parent=1 // pred_fallthru
      _
    // Predicated region
    $region62: #{tpu_custom_call.1} parent=1 // pred_check
      _
    $region63: #{tpu_custom_call.1} parent=1 // pred_check_branch
      %1723 = sbr.rel (0) target = $region65
    $region64: #{tpu_custom_call.1} parent=1 // pred_region
      %s1725 = ssub.s32 128, 128
      %1726 = vsyncadd [#allocation7], %s1725
      %s1728 = sshll.u32 [#allocation14], 4
      %s1729 = int_to_ptr.vmem [resolvable:$true] %s1728
      %1731 = dma.vmem_to_hbm [thread:$0]  %s1729, 128, %s8, [#allocation7]
    $region65: #{tpu_custom_call.1} parent=1 // pred_fallthru
      _
    // Predicated region
    $region66: #{tpu_custom_call.1} parent=1 // pred_check
      _
    $region67: #{tpu_custom_call.1} parent=1 // pred_check_branch
      %1733 = sbr.rel (0) target = $region69
    $region68: #{tpu_custom_call.1} parent=1 // pred_region
      %1734 = dma.done [#allocation7], 128
    $region69: #{tpu_custom_call.1} parent=1 // pred_fallthru
      _
    %1735 = vsyncpa [#allocation6], 1
    %1736 = vsyncpa [#allocation9], 1
    %1737 = vsyncpa [#allocation12], 1
    %1738 = vsyncpa [#allocation7], 1

</llo_original>
